<compile_context>
chip_gen: v7x
topology: tpu7x:2x2x1
jax: 0.10.0
libtpu: 0.0.40
codegen_flags: <defaults>
</compile_context>

<pallas_src>
import functools

import jax
import jax.numpy as jnp
from jax.experimental import pallas as pl
from jax.experimental.pallas import tpu as pltpu


# ----------------------------- kernel body ---------------------------------


def gru_gate_kernel(x_ref, y_ref, zrw_ref, wg_ref, ug_ref, bz_ref, o_ref):
    D = x_ref.shape[-1]

    x_in = x_ref[...]
    x_f32 = x_in.astype(jnp.float32)          # f32 for gate math / final blend
    y_bf = y_ref[...].astype(jnp.bfloat16)    # bf16 operands for the MXU

    # Fused z/r pre-activation: one K=2D dot (full MXU K on v6e/v7x).
    yx_bf = jnp.concatenate([y_bf, x_in.astype(jnp.bfloat16)], axis=-1)     # (tm, 2D)
    zr = jnp.dot(yx_bf, zrw_ref[...], preferred_element_type=jnp.float32)   # (tm, 2D)

    # Consume each slice of zr immediately (short live ranges).
    z = jax.nn.sigmoid(zr[:, :D] + bz_ref[...])     # w_z carries the -2 bias
    r = jax.nn.sigmoid(zr[:, D:])

    gy = jnp.dot(y_bf, wg_ref[...], preferred_element_type=jnp.float32)     # (tm, D)
    rx_bf = (r * x_f32).astype(jnp.bfloat16)
    h = jnp.tanh(gy + jnp.dot(rx_bf, ug_ref[...], preferred_element_type=jnp.float32))

    o_ref[...] = ((1.0 - z) * x_f32 + z * h).astype(o_ref.dtype)


# ----------------------------- wrapper --------------------------------------


def _round_up(n, m):
    return ((n + m - 1) // m) * m


def _pick_tm(M, D, itemsize):
    # ~1 MiB of activation per array per grid step; clamp to [256, 2048].
    # TODO(synk): per-generation sweep (v5e prefers ~512 once MXU-bound at D>=256).
    tm = max(256, min(2048, ((1 << 20) // (D * itemsize)) // 8 * 8))
    # Keep the 1-D parallel grid at >= 2 steps so both v7x TensorCores get work.
    tm = min(tm, max(8, _round_up(pl.cdiv(M, 2), 8)))
    return tm


def _vmem_limit_bytes(tm, D, itemsize, single_buffer_weights):
    act = 3 * 2 * tm * D * itemsize                    # x, y, out double-buffered
    wmult = 1 if single_buffer_weights else 2
    weights = wmult * (6 * D * D) * 2                  # zrw + wg + ug, bf16
    bias = wmult * 8 * _round_up(D, 128) * 4
    interm = 10 * tm * D * 4                           # f32 intermediates / spill headroom
    need = max(act + weights + bias + interm + (4 << 20), 16 << 20)
    try:
        cap = pltpu.get_tpu_info().vmem_capacity_bytes  # 64 MiB v7x, 128 MiB v5e/v6e
    except Exception:                                   # noqa: BLE001
        cap = 64 << 20                                  # conservative fallback
    return int(min(need, cap - (2 << 20)))


@functools.partial(jax.jit, static_argnames=("tm", "single_buffer_weights"))
def _gru_gate(x, y, packed, *, tm=None, single_buffer_weights=True):
    B, S, D = x.shape
    M = B * S
    # TODO(synk): if production D is not a multiple of 128, pad D (and the packed
    # weights) so the zr column slices and output stores stay lane-aligned.
    zrw, wg, ug, bz2 = packed

    x2 = x.reshape(M, D)
    y2 = y.reshape(M, D)

    itemsize = jnp.dtype(x.dtype).itemsize
    tm_eff = tm if tm is not None else _pick_tm(M, D, itemsize)
    tm_eff = max(8, min(_round_up(tm_eff, 8), _round_up(M, 8)))
    grid = (pl.cdiv(M, tm_eff),)   # trailing partial block handled/masked by Pallas

    row_spec = pl.BlockSpec((tm_eff, D), lambda i: (i, 0))

    def resident(shape):
        # Constant index map -> fetched once; Buffered(1) avoids a 2nd VMEM copy.
        if single_buffer_weights:
            return pl.BlockSpec(shape, lambda i: (0, 0), pipeline_mode=pl.Buffered(1))
        return pl.BlockSpec(shape, lambda i: (0, 0))

    cost = pl.CostEstimate(
        flops=2 * M * D * 6 * D,
        transcendentals=3 * M * D,
        bytes_accessed=3 * M * D * itemsize + 6 * D * D * 2 + D * 4,
    )

    out = pl.pallas_call(
        gru_gate_kernel,
        out_shape=jax.ShapeDtypeStruct((M, D), x.dtype),
        grid_spec=pltpu.PrefetchScalarGridSpec(
            num_scalar_prefetch=0,
            grid=grid,
            in_specs=[row_spec, row_spec,
                      resident((2 * D, 2 * D)),   # [[Wz^T Wr^T],[Uz^T Ur^T]] bf16
                      resident((D, D)),           # Wg^T bf16
                      resident((D, D)),           # Ug^T bf16
                      resident((1, D))],          # w_z bias (f32)
            out_specs=row_spec,
        ),
        compiler_params=pltpu.CompilerParams(
            dimension_semantics=("parallel",),    # row axis shards across v7x TCs
            vmem_limit_bytes=_vmem_limit_bytes(tm_eff, D, itemsize,
                                               single_buffer_weights),
        ),
        cost_estimate=cost,
    )(x2, y2, zrw, wg, ug, bz2)
    return out.reshape(B, S, D)


def gru_gate(x, y, packed, *, tm=None):
    """GTrXL GRU gate. `packed` comes from pack_params(). Prefers single-buffered
    resident weights (pl.Buffered(1)); retries without it if unsupported."""
    try:
        return _gru_gate(x, y, packed, tm=tm, single_buffer_weights=True)
    except Exception:  # noqa: BLE001 - pipeline_mode / Buffered(1) not supported here
        return _gru_gate(x, y, packed, tm=tm, single_buffer_weights=False)


# -------------------------- params / reference ------------------------------


def init_params(key, embed_size, dtype=jnp.float32):
    """nn.Linear default init (U[-1/sqrt(D), 1/sqrt(D)]); w_z.bias = -2."""
    k = 1.0 / jnp.sqrt(jnp.asarray(embed_size, jnp.float32))
    keys = jax.random.split(key, 6)

    def lin_wT(kk):
        # torch weight is (out, in); store its transpose (in, out) = (D, D)
        return jax.random.uniform(kk, (embed_size, embed_size), dtype, -k, k).T

    wrT, urT, wzT, uzT, wgT, ugT = (lin_wT(kk) for kk in keys)
    bz = jnp.full((embed_size,), -2.0, dtype)
    return (wzT, uzT, bz, wrT, urT, wgT, ugT)


def pack_params(params):
    """One-time (init-time) packing into the kernel layout:
       zrw (2D,2D) bf16 with [y|x] @ zrw = [z_pre | r_pre]; Wg^T/Ug^T (D,D) bf16;
       bias as a (1,D) f32 row."""
    wzT, uzT, bz, wrT, urT, wgT, ugT = params
    D = wzT.shape[0]
    zrw = jnp.concatenate(
        [jnp.concatenate([wzT, wrT], axis=1),    # rows 0:D multiply y
         jnp.concatenate([uzT, urT], axis=1)],   # rows D:2D multiply x
        axis=0).astype(jnp.bfloat16)             # (2D, 2D)
    return (zrw, wgT.astype(jnp.bfloat16), ugT.astype(jnp.bfloat16),
            bz.reshape(1, D).astype(jnp.float32))


def gru_gate_ref(x, y, params):
    """Plain-JAX f32 reference mirroring the PyTorch forward."""
    wzT, uzT, bz, wrT, urT, wgT, ugT = params
    dot = lambda a, wT: jnp.einsum("bsd,de->bse", a, wT)
    z = jax.nn.sigmoid(dot(y, wzT) + bz + dot(x, uzT))
    r = jax.nn.sigmoid(dot(y, wrT) + dot(x, urT))
    h = jnp.tanh(dot(y, wgT) + dot(r * x, ugT))
    return (1.0 - z) * x + z * h


# ------------------------------- test ---------------------------------------


def _check(B, S, D, key, dtype=jnp.float32, atol=3e-2):
    kx, ky, kp = jax.random.split(key, 3)
    x = jax.random.normal(kx, (B, S, D), dtype)
    y = jax.random.normal(ky, (B, S, D), dtype)
    params = init_params(kp, D)
    packed = pack_params(params)          # packed once, outside the per-call path

    out = jax.block_until_ready(gru_gate(x, y, packed))
    ref = gru_gate_ref(x.astype(jnp.float32), y.astype(jnp.float32), params)
    assert out.shape == (B, S, D) and out.dtype == dtype
    # bf16 MXU operands -> loosened tolerance vs the f32 reference.
    assert jnp.allclose(out.astype(jnp.float32), ref, atol=atol, rtol=atol), (
        f"mismatch vs reference at shape {(B, S, D)}")


if __name__ == "__main__":
    key = jax.random.PRNGKey(0)
    k1, k2 = jax.random.split(key)
    _check(2, 8, 128, k1)     # small M -> exercises the >=2-step grid split
    _check(3, 100, 128, k2)   # ragged M -> trailing partial block (no pad/slice)
    print("KERNEL_OK")
</pallas_src>

<mosaic_0001>
module attributes {stable_mosaic.version = 11 : i64} {
  func.func @gru_gate_kernel(%arg0: i32, %arg1: memref<8x128xf32, #tpu.memory_space<vmem>>, %arg2: memref<8x128xf32, #tpu.memory_space<vmem>>, %arg3: memref<256x256xbf16, #tpu.memory_space<vmem>>, %arg4: memref<128x128xbf16, #tpu.memory_space<vmem>>, %arg5: memref<128x128xbf16, #tpu.memory_space<vmem>>, %arg6: memref<1x128xf32, #tpu.memory_space<vmem>>, %arg7: memref<8x128xf32, #tpu.memory_space<vmem>>) attributes {dimension_semantics = [#tpu.dimension_semantics<parallel>], iteration_bounds = array<i64: 2>, scalar_prefetch = 0 : i64, scratch_operands = 0 : i64, tpu.core_type = #tpu.core_type<tc>, window_params = [{transform_indices = @transform_0, window_bounds = array<i64: 8, 128>}, {transform_indices = @transform_1, window_bounds = array<i64: 8, 128>}, {pipeline_mode = #tpu.pipeline_mode<synchronous>, transform_indices = @transform_2, window_bounds = array<i64: 256, 256>}, {pipeline_mode = #tpu.pipeline_mode<synchronous>, transform_indices = @transform_3, window_bounds = array<i64: 128, 128>}, {pipeline_mode = #tpu.pipeline_mode<synchronous>, transform_indices = @transform_4, window_bounds = array<i64: 128, 128>}, {pipeline_mode = #tpu.pipeline_mode<synchronous>, transform_indices = @transform_5, window_bounds = array<i64: 1, 128>}, {transform_indices = @transform_6, window_bounds = array<i64: 8, 128>}]} {
    %c0 = arith.constant 0 : index
    %c0_0 = arith.constant 0 : index
    %0 = vector.load %arg1[%c0, %c0_0] : memref<8x128xf32, #tpu.memory_space<vmem>>, vector<8x128xf32>
    %c0_1 = arith.constant 0 : index
    %c0_2 = arith.constant 0 : index
    %1 = vector.load %arg2[%c0_1, %c0_2] : memref<8x128xf32, #tpu.memory_space<vmem>>, vector<8x128xf32>
    %2 = arith.truncf %1 : vector<8x128xf32> to vector<8x128xbf16>
    %3 = arith.truncf %0 : vector<8x128xf32> to vector<8x128xbf16>
    %4 = tpu.concatenate %2, %3 in 1 : vector<8x128xbf16>, vector<8x128xbf16> -> vector<8x256xbf16>
    %c0_3 = arith.constant 0 : index
    %c0_4 = arith.constant 0 : index
    %5 = vector.load %arg3[%c0_3, %c0_4] : memref<256x256xbf16, #tpu.memory_space<vmem>>, vector<256x256xbf16>
    %cst = arith.constant dense<0.000000e+00> : vector<8x256xf32>
    %6 = tpu.matmul %4, %5, %cst {dimension_numbers = #tpu.dot_dimension_numbers<[1], [0], [0], [1], [0, 0, 1, 1], [], []>} : vector<8x256xbf16>, vector<256x256xbf16>, vector<8x256xf32> -> vector<8x256xf32>
    %7 = vector.extract_strided_slice %6 {offsets = [0, 0], sizes = [8, 128], strides = [1, 1]} : vector<8x256xf32> to vector<8x128xf32>
    %c0_5 = arith.constant 0 : index
    %c0_6 = arith.constant 0 : index
    %8 = vector.load %arg6[%c0_5, %c0_6] : memref<1x128xf32, #tpu.memory_space<vmem>>, vector<1x128xf32>
    %9 = vector.broadcast %8 : vector<1x128xf32> to vector<8x128xf32>
    %10 = arith.addf %7, %9 : vector<8x128xf32>
    %11 = arith.negf %10 : vector<8x128xf32>
    %12 = math.exp %11 : vector<8x128xf32>
    %cst_7 = arith.constant 1.000000e+00 : f32
    %13 = vector.broadcast %cst_7 : f32 to vector<8x128xf32>
    %14 = arith.addf %13, %12 : vector<8x128xf32>
    %15 = arith.divf %13, %14 : vector<8x128xf32>
    %16 = vector.extract_strided_slice %6 {offsets = [0, 128], sizes = [8, 128], strides = [1, 1]} : vector<8x256xf32> to vector<8x128xf32>
    %17 = arith.negf %16 : vector<8x128xf32>
    %18 = math.exp %17 : vector<8x128xf32>
    %cst_8 = arith.constant 1.000000e+00 : f32
    %19 = vector.broadcast %cst_8 : f32 to vector<8x128xf32>
    %20 = arith.addf %19, %18 : vector<8x128xf32>
    %21 = arith.divf %19, %20 : vector<8x128xf32>
    %c0_9 = arith.constant 0 : index
    %c0_10 = arith.constant 0 : index
    %22 = vector.load %arg4[%c0_9, %c0_10] : memref<128x128xbf16, #tpu.memory_space<vmem>>, vector<128x128xbf16>
    %cst_11 = arith.constant dense<0.000000e+00> : vector<8x128xf32>
    %23 = tpu.matmul %2, %22, %cst_11 {dimension_numbers = #tpu.dot_dimension_numbers<[1], [0], [0], [1], [0, 0, 1, 1], [], []>} : vector<8x128xbf16>, vector<128x128xbf16>, vector<8x128xf32> -> vector<8x128xf32>
    %24 = arith.mulf %21, %0 : vector<8x128xf32>
    %25 = arith.truncf %24 : vector<8x128xf32> to vector<8x128xbf16>
    %c0_12 = arith.constant 0 : index
    %c0_13 = arith.constant 0 : index
    %26 = vector.load %arg5[%c0_12, %c0_13] : memref<128x128xbf16, #tpu.memory_space<vmem>>, vector<128x128xbf16>
    %cst_14 = arith.constant dense<0.000000e+00> : vector<8x128xf32>
    %27 = tpu.matmul %25, %26, %cst_14 {dimension_numbers = #tpu.dot_dimension_numbers<[1], [0], [0], [1], [0, 0, 1, 1], [], []>} : vector<8x128xbf16>, vector<128x128xbf16>, vector<8x128xf32> -> vector<8x128xf32>
    %28 = arith.addf %23, %27 : vector<8x128xf32>
    %29 = math.tanh %28 : vector<8x128xf32>
    %cst_15 = arith.constant 1.000000e+00 : f32
    %30 = vector.broadcast %cst_15 : f32 to vector<8x128xf32>
    %31 = arith.subf %30, %15 : vector<8x128xf32>
    %32 = arith.mulf %31, %0 : vector<8x128xf32>
    %33 = arith.mulf %15, %29 : vector<8x128xf32>
    %34 = arith.addf %32, %33 : vector<8x128xf32>
    %c0_16 = arith.constant 0 : index
    %c0_17 = arith.constant 0 : index
    %35 = vector.load %arg7[%c0_16, %c0_17] : memref<8x128xf32, #tpu.memory_space<vmem>>, vector<8x128xf32>
    tpu.vector_store %arg7[%c0_16, %c0_17], %34 {strides = array<i32>} : memref<8x128xf32, #tpu.memory_space<vmem>>, vector<8x128xf32>,
    return
  }
  func.func @transform_0(%arg0: i32) -> (i32, i32) {
    %c0_i32 = arith.constant 0 : i32
    %c0_i32_0 = arith.constant 0 : i32
    return %arg0, %c0_i32 : i32, i32
  }
  func.func @transform_1(%arg0: i32) -> (i32, i32) {
    %c0_i32 = arith.constant 0 : i32
    %c0_i32_0 = arith.constant 0 : i32
    return %arg0, %c0_i32 : i32, i32
  }
  func.func @transform_2(%arg0: i32) -> (i32, i32) {
    %c0_i32 = arith.constant 0 : i32
    %c0_i32_0 = arith.constant 0 : i32
    %c0_i32_1 = arith.constant 0 : i32
    return %c0_i32, %c0_i32_0 : i32, i32
  }
  func.func @transform_3(%arg0: i32) -> (i32, i32) {
    %c0_i32 = arith.constant 0 : i32
    %c0_i32_0 = arith.constant 0 : i32
    %c0_i32_1 = arith.constant 0 : i32
    return %c0_i32, %c0_i32_0 : i32, i32
  }
  func.func @transform_4(%arg0: i32) -> (i32, i32) {
    %c0_i32 = arith.constant 0 : i32
    %c0_i32_0 = arith.constant 0 : i32
    %c0_i32_1 = arith.constant 0 : i32
    return %c0_i32, %c0_i32_0 : i32, i32
  }
  func.func @transform_5(%arg0: i32) -> (i32, i32) {
    %c0_i32 = arith.constant 0 : i32
    %c0_i32_0 = arith.constant 0 : i32
    %c0_i32_1 = arith.constant 0 : i32
    return %c0_i32, %c0_i32_0 : i32, i32
  }
  func.func @transform_6(%arg0: i32) -> (i32, i32) {
    %c0_i32 = arith.constant 0 : i32
    %c0_i32_0 = arith.constant 0 : i32
    return %arg0, %c0_i32 : i32, i32
  }
}

module attributes {stable_mosaic.version = 11 : i64} {
  func.func @gru_gate_kernel(%arg0: i32, %arg1: memref<8x128xf32, #tpu.memory_space<vmem>>, %arg2: memref<8x128xf32, #tpu.memory_space<vmem>>, %arg3: memref<256x256xbf16, #tpu.memory_space<vmem>>, %arg4: memref<128x128xbf16, #tpu.memory_space<vmem>>, %arg5: memref<128x128xbf16, #tpu.memory_space<vmem>>, %arg6: memref<1x128xf32, #tpu.memory_space<vmem>>, %arg7: memref<8x128xf32, #tpu.memory_space<vmem>>) attributes {dimension_semantics = [#tpu.dimension_semantics<parallel>], iteration_bounds = array<i64: 2>, scalar_prefetch = 0 : i64, scratch_operands = 0 : i64, tpu.core_type = #tpu.core_type<tc>, window_params = [{transform_indices = @transform_0, window_bounds = array<i64: 8, 128>}, {transform_indices = @transform_1, window_bounds = array<i64: 8, 128>}, {pipeline_mode = #tpu.pipeline_mode<synchronous>, transform_indices = @transform_2, window_bounds = array<i64: 256, 256>}, {pipeline_mode = #tpu.pipeline_mode<synchronous>, transform_indices = @transform_3, window_bounds = array<i64: 128, 128>}, {pipeline_mode = #tpu.pipeline_mode<synchronous>, transform_indices = @transform_4, window_bounds = array<i64: 128, 128>}, {pipeline_mode = #tpu.pipeline_mode<synchronous>, transform_indices = @transform_5, window_bounds = array<i64: 1, 128>}, {transform_indices = @transform_6, window_bounds = array<i64: 8, 128>}]} {
    %c0 = arith.constant 0 : index
    %c0_0 = arith.constant 0 : index
    %0 = vector.load %arg1[%c0, %c0_0] : memref<8x128xf32, #tpu.memory_space<vmem>>, vector<8x128xf32>
    %c0_1 = arith.constant 0 : index
    %c0_2 = arith.constant 0 : index
    %1 = vector.load %arg2[%c0_1, %c0_2] : memref<8x128xf32, #tpu.memory_space<vmem>>, vector<8x128xf32>
    %2 = arith.truncf %1 : vector<8x128xf32> to vector<8x128xbf16>
    %3 = arith.truncf %0 : vector<8x128xf32> to vector<8x128xbf16>
    %4 = tpu.concatenate %2, %3 in 1 : vector<8x128xbf16>, vector<8x128xbf16> -> vector<8x256xbf16>
    %c0_3 = arith.constant 0 : index
    %c0_4 = arith.constant 0 : index
    %5 = vector.load %arg3[%c0_3, %c0_4] : memref<256x256xbf16, #tpu.memory_space<vmem>>, vector<256x256xbf16>
    %cst = arith.constant dense<0.000000e+00> : vector<8x256xf32>
    %6 = tpu.matmul %4, %5, %cst {dimension_numbers = #tpu.dot_dimension_numbers<[1], [0], [0], [1], [0, 0, 1, 1], [], []>} : vector<8x256xbf16>, vector<256x256xbf16>, vector<8x256xf32> -> vector<8x256xf32>
    %7 = vector.extract_strided_slice %6 {offsets = [0, 0], sizes = [8, 128], strides = [1, 1]} : vector<8x256xf32> to vector<8x128xf32>
    %c0_5 = arith.constant 0 : index
    %c0_6 = arith.constant 0 : index
    %8 = vector.load %arg6[%c0_5, %c0_6] : memref<1x128xf32, #tpu.memory_space<vmem>>, vector<1x128xf32>
    %9 = vector.broadcast %8 : vector<1x128xf32> to vector<8x128xf32>
    %10 = arith.addf %7, %9 : vector<8x128xf32>
    %11 = arith.negf %10 : vector<8x128xf32>
    %12 = math.exp %11 : vector<8x128xf32>
    %cst_7 = arith.constant 1.000000e+00 : f32
    %13 = vector.broadcast %cst_7 : f32 to vector<8x128xf32>
    %14 = arith.addf %13, %12 : vector<8x128xf32>
    %15 = arith.divf %13, %14 : vector<8x128xf32>
    %16 = vector.extract_strided_slice %6 {offsets = [0, 128], sizes = [8, 128], strides = [1, 1]} : vector<8x256xf32> to vector<8x128xf32>
    %17 = arith.negf %16 : vector<8x128xf32>
    %18 = math.exp %17 : vector<8x128xf32>
    %cst_8 = arith.constant 1.000000e+00 : f32
    %19 = vector.broadcast %cst_8 : f32 to vector<8x128xf32>
    %20 = arith.addf %19, %18 : vector<8x128xf32>
    %21 = arith.divf %19, %20 : vector<8x128xf32>
    %c0_9 = arith.constant 0 : index
    %c0_10 = arith.constant 0 : index
    %22 = vector.load %arg4[%c0_9, %c0_10] : memref<128x128xbf16, #tpu.memory_space<vmem>>, vector<128x128xbf16>
    %cst_11 = arith.constant dense<0.000000e+00> : vector<8x128xf32>
    %23 = tpu.matmul %2, %22, %cst_11 {dimension_numbers = #tpu.dot_dimension_numbers<[1], [0], [0], [1], [0, 0, 1, 1], [], []>} : vector<8x128xbf16>, vector<128x128xbf16>, vector<8x128xf32> -> vector<8x128xf32>
    %24 = arith.mulf %21, %0 : vector<8x128xf32>
    %25 = arith.truncf %24 : vector<8x128xf32> to vector<8x128xbf16>
    %c0_12 = arith.constant 0 : index
    %c0_13 = arith.constant 0 : index
    %26 = vector.load %arg5[%c0_12, %c0_13] : memref<128x128xbf16, #tpu.memory_space<vmem>>, vector<128x128xbf16>
    %cst_14 = arith.constant dense<0.000000e+00> : vector<8x128xf32>
    %27 = tpu.matmul %25, %26, %cst_14 {dimension_numbers = #tpu.dot_dimension_numbers<[1], [0], [0], [1], [0, 0, 1, 1], [], []>} : vector<8x128xbf16>, vector<128x128xbf16>, vector<8x128xf32> -> vector<8x128xf32>
    %28 = arith.addf %23, %27 : vector<8x128xf32>
    %29 = math.tanh %28 : vector<8x128xf32>
    %cst_15 = arith.constant 1.000000e+00 : f32
    %30 = vector.broadcast %cst_15 : f32 to vector<8x128xf32>
    %31 = arith.subf %30, %15 : vector<8x128xf32>
    %32 = arith.mulf %31, %0 : vector<8x128xf32>
    %33 = arith.mulf %15, %29 : vector<8x128xf32>
    %34 = arith.addf %32, %33 : vector<8x128xf32>
    %c0_16 = arith.constant 0 : index
    %c0_17 = arith.constant 0 : index
    %35 = vector.load %arg7[%c0_16, %c0_17] : memref<8x128xf32, #tpu.memory_space<vmem>>, vector<8x128xf32>
    tpu.vector_store %arg7[%c0_16, %c0_17], %34 {strides = array<i32>} : memref<8x128xf32, #tpu.memory_space<vmem>>, vector<8x128xf32>,
    return
  }
  func.func @transform_0(%arg0: i32) -> (i32, i32) {
    %c0_i32 = arith.constant 0 : i32
    %c0_i32_0 = arith.constant 0 : i32
    return %arg0, %c0_i32 : i32, i32
  }
  func.func @transform_1(%arg0: i32) -> (i32, i32) {
    %c0_i32 = arith.constant 0 : i32
    %c0_i32_0 = arith.constant 0 : i32
    return %arg0, %c0_i32 : i32, i32
  }
  func.func @transform_2(%arg0: i32) -> (i32, i32) {
    %c0_i32 = arith.constant 0 : i32
    %c0_i32_0 = arith.constant 0 : i32
    %c0_i32_1 = arith.constant 0 : i32
    return %c0_i32, %c0_i32_0 : i32, i32
  }
  func.func @transform_3(%arg0: i32) -> (i32, i32) {
    %c0_i32 = arith.constant 0 : i32
    %c0_i32_0 = arith.constant 0 : i32
    %c0_i32_1 = arith.constant 0 : i32
    return %c0_i32, %c0_i32_0 : i32, i32
  }
  func.func @transform_4(%arg0: i32) -> (i32, i32) {
    %c0_i32 = arith.constant 0 : i32
    %c0_i32_0 = arith.constant 0 : i32
    %c0_i32_1 = arith.constant 0 : i32
    return %c0_i32, %c0_i32_0 : i32, i32
  }
  func.func @transform_5(%arg0: i32) -> (i32, i32) {
    %c0_i32 = arith.constant 0 : i32
    %c0_i32_0 = arith.constant 0 : i32
    %c0_i32_1 = arith.constant 0 : i32
    return %c0_i32, %c0_i32_0 : i32, i32
  }
  func.func @transform_6(%arg0: i32) -> (i32, i32) {
    %c0_i32 = arith.constant 0 : i32
    %c0_i32_0 = arith.constant 0 : i32
    return %arg0, %c0_i32 : i32, i32
  }
}

</mosaic_0001>

<llo_original>
// kernel: _gru_gate.1
$region0: #{_gru_gate.1}
  #allocation0 [shape = 'u32[]', space=smem, size = 0x4, offset = 0x4, fixed_abs, tag = 'smem constant byte address 0x4 - core index']
  #allocation1 [shape = 'u32[144,128]{1,0:T(1,128)}', space=vmem, size = 0x12000, scoped, tag = 'internal scratch']
  %s0 = inlined_call_operand.hbm [shape: f32[16,128], index: 0, kind: input, shape index: {}]
  %s1 = inlined_call_operand.hbm [shape: f32[16,128], index: 1, kind: input, shape index: {}]
  %s2 = inlined_call_operand.hbm [shape: bf16[256,256], index: 2, kind: input, shape index: {}]
  %s3 = inlined_call_operand.hbm [shape: bf16[128,128], index: 3, kind: input, shape index: {}]
  %s4 = inlined_call_operand.hbm [shape: bf16[128,128], index: 4, kind: input, shape index: {}]
  %s5 = inlined_call_operand.vmem [shape: f32[1,128], index: 5, kind: input, shape index: {}]
  %s6 = inlined_call_operand.hbm [shape: f32[16,128], index: 6, kind: output, shape index: {}]
  %s7 = sld [smem:[#allocation0]]
  $region77: #{_gru_gate.1} parent=0
    _
  %s9 = ssub.s32 1, %s7
  %s10 = scalar_select 0, %s9, %s7
  $region1: #{_gru_gate.1} parent=0
    #allocation2 [shape = 'u8[8192]{0}', space=vmem, size = 0x2000, scoped, tag = 'input window, operand 0']
    #allocation3 [shape = 's32[2]{0}', space=sflag, size = 0x8, scoped, tag = 'scoped memory for _gru_gate.1']
    #allocation4 [shape = 's32[2]{0}', space=sflag, size = 0x8, scoped, tag = 'scoped memory for _gru_gate.1']
    #allocation5 [shape = 'u8[8192]{0}', space=vmem, size = 0x2000, scoped, tag = 'input window, operand 1']
    #allocation6 [shape = 's32[2]{0}', space=sflag, size = 0x8, scoped, tag = 'scoped memory for _gru_gate.1']
    #allocation7 [shape = 'u8[131072]{0}', space=vmem, size = 0x20000, scoped, tag = 'input window, operand 2, single buffered']
    #allocation8 [shape = 'u8[32768]{0}', space=vmem, size = 0x8000, scoped, tag = 'input window, operand 3, single buffered']
    #allocation9 [shape = 's32[1]{0}', space=sflag, size = 0x4, scoped, tag = 'scoped memory for _gru_gate.1']
    #allocation10 [shape = 'u8[32768]{0}', space=vmem, size = 0x8000, scoped, tag = 'input window, operand 4, single buffered']
    #allocation11 [shape = 'u8[8192]{0}', space=vmem, size = 0x2000, scoped, tag = 'output window, operand 0']
    %11 = vsyncpa [#allocation3], 0
    %s12 = scalar_lea.sflag [#allocation3], 1
    %13 = vsyncpa %s12, 0
    %14 = vsyncpa [#allocation6], 0
    %s15 = scalar_lea.sflag [#allocation6], 1
    %16 = vsyncpa %s15, 0
    %17 = vsyncpa [#allocation9], 0
    %18 = vsyncpa [#allocation4], 0
    %s19 = scalar_lea.sflag [#allocation4], 1
    %20 = vsyncpa %s19, 0
    loop: start=0, step=1, limit=4
    $region2: #{_gru_gate.1} parent=1 // loop_pre_header
      _
    $region3: #{_gru_gate.1} parent=1 // loop_header
      %s22 = sphi 0, %s26
      %p23 = scmp.ge.s32.totalorder %s22, 4
      %s32 = sphi 0, %s34
      %s35 = sphi 0, %s32
      %s36 = sphi 0, %s35
      %s52 = sphi 0, %s36
      %s58 = sphi 0, %s60
      %s61 = sphi 0, %s58
      %s62 = sphi 0, %s61
      %s78 = sphi 0, %s62
      %s82 = sphi 0, %s82
      %s84 = sphi 0, %s82
      %s85 = sphi 0, %s84
      %s99 = sphi 0, %s85
      %s103 = sphi 0, %s103
      %s105 = sphi 0, %s103
      %s106 = sphi 0, %s105
      %s120 = sphi 0, %s106
      %s124 = sphi 0, %s124
      %s126 = sphi 0, %s124
      %s127 = sphi 0, %s126
      %s141 = sphi 0, %s127
      %s145 = sphi 0, %s145
      %s147 = sphi 0, %s145
      %s148 = sphi 0, %s147
      %s162 = sphi 0, %s148
      %s168 = sphi 0, %s170
      %s171 = sphi 0, %s168
      %s172 = sphi 0, %s171
      %s188 = sphi 0, %s172
    $region4: #{_gru_gate.1} parent=1 // loop_header_branch
      %25 = sbr.rel (%p23) target = $region8
    $region5: #{_gru_gate.1} parent=1 // loop_body
      %s27 = ssub.s32 %s22, 1
      %s28 = ssub.s32 %s22, 2
      %s29 = sadd.s32 %s22, 1
      %s30 = ssub.s32 %s22, %s29
      %p31 = scmp.eq.s32.totalorder %s30, 0
      %s33 = sadd.s32 %s32, 1
      %s34 = scalar_select %p31, %s32, %s33
      %p37 = pneg %p31
      %p38 = scmp.eq.s32.totalorder %s22, 1
      %p39 = por %p37, %p38
      %p40 = scmp.ne.s32.totalorder %s32, %s35
      %p41 = scmp.eq.s32.totalorder %s22, 0
      %p42 = por %p40, %p41
      %p43 = scmp.ne.s32.totalorder %s32, %s35
      %p44 = scmp.eq.s32.totalorder %s27, 1
      %p45 = por %p43, %p44
      %p46 = scmp.ne.s32.totalorder %s35, %s36
      %p47 = scmp.eq.s32.totalorder %s27, 0
      %p48 = por %p46, %p47
      %p49 = scmp.ne.s32.totalorder %s35, %s36
      %p50 = scmp.eq.s32.totalorder %s28, 1
      %p51 = por %p49, %p50
      %p53 = scmp.ne.s32.totalorder %s36, %s52
      %p54 = scmp.eq.s32.totalorder %s28, 0
      %p55 = por %p53, %p54
      %s56 = ssub.s32 %s22, %s29
      %p57 = scmp.eq.s32.totalorder %s56, 0
      %s59 = sadd.s32 %s58, 1
      %s60 = scalar_select %p57, %s58, %s59
      %p63 = pneg %p57
      %p64 = scmp.eq.s32.totalorder %s22, 1
      %p65 = por %p63, %p64
      %p66 = scmp.ne.s32.totalorder %s58, %s61
      %p67 = scmp.eq.s32.totalorder %s22, 0
      %p68 = por %p66, %p67
      %p69 = scmp.ne.s32.totalorder %s58, %s61
      %p70 = scmp.eq.s32.totalorder %s27, 1
      %p71 = por %p69, %p70
      %p72 = scmp.ne.s32.totalorder %s61, %s62
      %p73 = scmp.eq.s32.totalorder %s27, 0
      %p74 = por %p72, %p73
      %p75 = scmp.ne.s32.totalorder %s61, %s62
      %p76 = scmp.eq.s32.totalorder %s28, 1
      %p77 = por %p75, %p76
      %p79 = scmp.ne.s32.totalorder %s62, %s78
      %p80 = scmp.eq.s32.totalorder %s28, 0
      %p81 = por %p79, %p80
      %s83 = sadd.s32 %s82, 1
      %p86 = scmp.eq.s32.totalorder %s22, 1
      %p87 = scmp.ne.s32.totalorder %s82, %s84
      %p88 = scmp.eq.s32.totalorder %s22, 0
      %p89 = por %p87, %p88
      %p90 = scmp.ne.s32.totalorder %s82, %s84
      %p91 = scmp.eq.s32.totalorder %s27, 1
      %p92 = por %p90, %p91
      %p93 = scmp.ne.s32.totalorder %s84, %s85
      %p94 = scmp.eq.s32.totalorder %s27, 0
      %p95 = por %p93, %p94
      %p96 = scmp.ne.s32.totalorder %s84, %s85
      %p97 = scmp.eq.s32.totalorder %s28, 1
      %p98 = por %p96, %p97
      %p100 = scmp.ne.s32.totalorder %s85, %s99
      %p101 = scmp.eq.s32.totalorder %s28, 0
      %p102 = por %p100, %p101
      %s104 = sadd.s32 %s103, 1
      %p107 = scmp.eq.s32.totalorder %s22, 1
      %p108 = scmp.ne.s32.totalorder %s103, %s105
      %p109 = scmp.eq.s32.totalorder %s22, 0
      %p110 = por %p108, %p109
      %p111 = scmp.ne.s32.totalorder %s103, %s105
      %p112 = scmp.eq.s32.totalorder %s27, 1
      %p113 = por %p111, %p112
      %p114 = scmp.ne.s32.totalorder %s105, %s106
      %p115 = scmp.eq.s32.totalorder %s27, 0
      %p116 = por %p114, %p115
      %p117 = scmp.ne.s32.totalorder %s105, %s106
      %p118 = scmp.eq.s32.totalorder %s28, 1
      %p119 = por %p117, %p118
      %p121 = scmp.ne.s32.totalorder %s106, %s120
      %p122 = scmp.eq.s32.totalorder %s28, 0
      %p123 = por %p121, %p122
      %s125 = sadd.s32 %s124, 1
      %p128 = scmp.eq.s32.totalorder %s22, 1
      %p129 = scmp.ne.s32.totalorder %s124, %s126
      %p130 = scmp.eq.s32.totalorder %s22, 0
      %p131 = por %p129, %p130
      %p132 = scmp.ne.s32.totalorder %s124, %s126
      %p133 = scmp.eq.s32.totalorder %s27, 1
      %p134 = por %p132, %p133
      %p135 = scmp.ne.s32.totalorder %s126, %s127
      %p136 = scmp.eq.s32.totalorder %s27, 0
      %p137 = por %p135, %p136
      %p138 = scmp.ne.s32.totalorder %s126, %s127
      %p139 = scmp.eq.s32.totalorder %s28, 1
      %p140 = por %p138, %p139
      %p142 = scmp.ne.s32.totalorder %s127, %s141
      %p143 = scmp.eq.s32.totalorder %s28, 0
      %p144 = por %p142, %p143
      %s146 = sadd.s32 %s145, 1
      %p149 = scmp.eq.s32.totalorder %s22, 1
      %p150 = scmp.ne.s32.totalorder %s145, %s147
      %p151 = scmp.eq.s32.totalorder %s22, 0
      %p152 = por %p150, %p151
      %p153 = scmp.ne.s32.totalorder %s145, %s147
      %p154 = scmp.eq.s32.totalorder %s27, 1
      %p155 = por %p153, %p154
      %p156 = scmp.ne.s32.totalorder %s147, %s148
      %p157 = scmp.eq.s32.totalorder %s27, 0
      %p158 = por %p156, %p157
      %p159 = scmp.ne.s32.totalorder %s147, %s148
      %p160 = scmp.eq.s32.totalorder %s28, 1
      %p161 = por %p159, %p160
      %p163 = scmp.ne.s32.totalorder %s148, %s162
      %p164 = scmp.eq.s32.totalorder %s28, 0
      %p165 = por %p163, %p164
      %s166 = ssub.s32 %s22, %s29
      %p167 = scmp.eq.s32.totalorder %s166, 0
      %s169 = sadd.s32 %s168, 1
      %s170 = scalar_select %p167, %s168, %s169
      %p173 = pneg %p167
      %p174 = scmp.eq.s32.totalorder %s22, 1
      %p175 = por %p173, %p174
      %p176 = scmp.ne.s32.totalorder %s168, %s171
      %p177 = scmp.eq.s32.totalorder %s22, 0
      %p178 = por %p176, %p177
      %p179 = scmp.ne.s32.totalorder %s168, %s171
      %p180 = scmp.eq.s32.totalorder %s27, 1
      %p181 = por %p179, %p180
      %p182 = scmp.ne.s32.totalorder %s171, %s172
      %p183 = scmp.eq.s32.totalorder %s27, 0
      %p184 = por %p182, %p183
      %p185 = scmp.ne.s32.totalorder %s171, %s172
      %p186 = scmp.eq.s32.totalorder %s28, 1
      %p187 = por %p185, %p186
      %p189 = scmp.ne.s32.totalorder %s172, %s188
      %p190 = scmp.eq.s32.totalorder %s28, 0
      %p191 = por %p189, %p190
      %p192 = scmp.le.s32.totalorder 1, %s22
      %p193 = scmp.lt.s32.totalorder %s22, 3
      %p194 = pnand %p192, %p193
      %p195 = pneg %p194
      // Predicated region
      $region9: #{_gru_gate.1} parent=5 // pred_check
        _
      $region10: #{_gru_gate.1} parent=5 // pred_check_branch
        %197 = sbr.rel (%p194) target = $region12
      $region11: #{_gru_gate.1} parent=5 // pred_region
        %s198 = ssub.s32 %s22, 1
        // Predicated region
        $region13: #{_gru_gate.1} parent=11 // pred_check
          %p199 = pneg %p95
        $region14: #{_gru_gate.1} parent=11 // pred_check_branch
          %201 = sbr.rel (%p199) target = $region16
        $region15: #{_gru_gate.1} parent=11 // pred_region
          %s203 = ssub.s32 4096, 4096
          %204 = vsyncadd [#allocation6], %s203
          %s205 = sshll.u32 [#allocation7], 4
          %s206 = int_to_ptr.vmem [resolvable:$true] %s205
          %211 = dma.hbm_to_vmem [thread:$0]  %s2, 4096, %s206, [#allocation6], 128, 128, 8
        $region16: #{_gru_gate.1} parent=11 // pred_fallthru
          _
        // Predicated region
        $region17: #{_gru_gate.1} parent=11 // pred_check
          %p212 = pneg %p116
        $region18: #{_gru_gate.1} parent=11 // pred_check_branch
          %214 = sbr.rel (%p212) target = $region20
        $region19: #{_gru_gate.1} parent=11 // pred_region
          %s216 = ssub.s32 1024, 1024
          %217 = vsyncadd [#allocation9], %s216
          %s218 = sshll.u32 [#allocation8], 4
          %s219 = int_to_ptr.vmem [resolvable:$true] %s218
          %224 = dma.hbm_to_vmem [thread:$0]  %s3, 1024, %s219, [#allocation9], 64, 64, 4
        $region20: #{_gru_gate.1} parent=11 // pred_fallthru
          _
        // Predicated region
        $region21: #{_gru_gate.1} parent=11 // pred_check
          %p225 = pneg %p137
        $region22: #{_gru_gate.1} parent=11 // pred_check_branch
          %227 = sbr.rel (%p225) target = $region24
        $region23: #{_gru_gate.1} parent=11 // pred_region
          %s229 = ssub.s32 1024, 1024
          %230 = vsyncadd [#allocation9], %s229
          %s231 = sshll.u32 [#allocation10], 4
          %s232 = int_to_ptr.vmem [resolvable:$true] %s231
          %237 = dma.hbm_to_vmem [thread:$0]  %s4, 1024, %s232, [#allocation9], 64, 64, 4
        $region24: #{_gru_gate.1} parent=11 // pred_fallthru
          _
        // Predicated region
        $region25: #{_gru_gate.1} parent=11 // pred_check
          %p238 = pneg %p158
        $region26: #{_gru_gate.1} parent=11 // pred_check_branch
          %240 = sbr.rel (%p238) target = $region28
        $region27: #{_gru_gate.1} parent=11 // pred_region
          _
        $region28: #{_gru_gate.1} parent=11 // pred_fallthru
          _
      $region12: #{_gru_gate.1} parent=5 // pred_fallthru
        _
      %p241 = scmp.lt.s32.totalorder %s22, 2
      // Predicated region
      $region29: #{_gru_gate.1} parent=5 // pred_check
        %p242 = pneg %p241
      $region30: #{_gru_gate.1} parent=5 // pred_check_branch
        %244 = sbr.rel (%p242) target = $region32
      $region31: #{_gru_gate.1} parent=5 // pred_region
        // Predicated region
        $region33: #{_gru_gate.1} parent=31 // pred_check
          %p245 = pneg %p42
        $region34: #{_gru_gate.1} parent=31 // pred_check_branch
          %247 = sbr.rel (%p245) target = $region36
        $region35: #{_gru_gate.1} parent=31 // pred_region
          %s248 = sand.u32 %s32, 1
          %s249 = scalar_lea.sflag [#allocation3], %s248
          %s250 = sand.u32 %s32, 1
          %s251 = smul.addr %s250, 8
          %s252 = scalar_lea.vmem [#allocation2], %s251
          %s254 = ssub.s32 128, 128
          %255 = vsyncadd %s249, %s254
          %s256 = smul.addr %s22, 128
          %s257 = scalar_lea.hbm %s0, %s256
          %s259 = sshll.u32 %s252, 4
          %s260 = int_to_ptr.vmem [resolvable:$true] %s259
          %262 = dma.hbm_to_vmem [thread:$0]  %s257, 128, %s260, %s249
        $region36: #{_gru_gate.1} parent=31 // pred_fallthru
          _
        // Predicated region
        $region37: #{_gru_gate.1} parent=31 // pred_check
          %p263 = pneg %p68
        $region38: #{_gru_gate.1} parent=31 // pred_check_branch
          %265 = sbr.rel (%p263) target = $region40
        $region39: #{_gru_gate.1} parent=31 // pred_region
          %s266 = sand.u32 %s22, 1
          %s267 = scalar_lea.sflag [#allocation6], %s266
          %s268 = sand.u32 %s58, 1
          %s269 = smul.addr %s268, 8
          %s270 = scalar_lea.vmem [#allocation5], %s269
          %s272 = ssub.s32 128, 128
          %273 = vsyncadd %s267, %s272
          %s274 = smul.addr %s22, 128
          %s275 = scalar_lea.hbm %s1, %s274
          %s277 = sshll.u32 %s270, 4
          %s278 = int_to_ptr.vmem [resolvable:$true] %s277
          %280 = dma.hbm_to_vmem [thread:$0]  %s275, 128, %s278, %s267
        $region40: #{_gru_gate.1} parent=31 // pred_fallthru
          _
      $region32: #{_gru_gate.1} parent=5 // pred_fallthru
        _
      %p281 = scmp.le.s32.totalorder 1, %s22
      %p282 = scmp.lt.s32.totalorder %s22, 3
      %p283 = pnand %p281, %p282
      %p284 = pneg %p283
      // Predicated region
      $region41: #{_gru_gate.1} parent=5 // pred_check
        _
      $region42: #{_gru_gate.1} parent=5 // pred_check_branch
        %286 = sbr.rel (%p283) target = $region44
      $region43: #{_gru_gate.1} parent=5 // pred_region
        %s287 = ssub.s32 %s22, 1
        %s288 = sand.u32 %s35, 1
        %s289 = scalar_lea.sflag [#allocation3], %s288
        %s290 = sand.u32 %s35, 1
        %s291 = smul.addr %s290, 8
        %s292 = scalar_lea.vmem [#allocation2], %s291
        // Predicated region
        $region45: #{_gru_gate.1} parent=43 // pred_check
          %p293 = pneg %p48
        $region46: #{_gru_gate.1} parent=43 // pred_check_branch
          %295 = sbr.rel (%p293) target = $region48
        $region47: #{_gru_gate.1} parent=43 // pred_region
          %296 = dma.done %s289, 128
        $region48: #{_gru_gate.1} parent=43 // pred_fallthru
          _
        %s297 = sand.u32 %s27, 1
        %s298 = scalar_lea.sflag [#allocation6], %s297
        %s299 = sand.u32 %s61, 1
        %s300 = smul.addr %s299, 8
        %s301 = scalar_lea.vmem [#allocation5], %s300
        // Predicated region
        $region49: #{_gru_gate.1} parent=43 // pred_check
          %p302 = pneg %p74
        $region50: #{_gru_gate.1} parent=43 // pred_check_branch
          %304 = sbr.rel (%p302) target = $region52
        $region51: #{_gru_gate.1} parent=43 // pred_region
          %305 = dma.done %s298, 128
        $region52: #{_gru_gate.1} parent=43 // pred_fallthru
          _
        // Predicated region
        $region53: #{_gru_gate.1} parent=43 // pred_check
          %p306 = pneg %p95
        $region54: #{_gru_gate.1} parent=43 // pred_check_branch
          %308 = sbr.rel (%p306) target = $region56
        $region55: #{_gru_gate.1} parent=43 // pred_region
          %309 = dma.done [#allocation6], 4096
        $region56: #{_gru_gate.1} parent=43 // pred_fallthru
          _
        // Predicated region
        $region57: #{_gru_gate.1} parent=43 // pred_check
          %p310 = pneg %p116
        $region58: #{_gru_gate.1} parent=43 // pred_check_branch
          %312 = sbr.rel (%p310) target = $region60
        $region59: #{_gru_gate.1} parent=43 // pred_region
          %313 = dma.done [#allocation9], 1024
        $region60: #{_gru_gate.1} parent=43 // pred_fallthru
          _
        // Predicated region
        $region61: #{_gru_gate.1} parent=43 // pred_check
          %p314 = pneg %p137
        $region62: #{_gru_gate.1} parent=43 // pred_check_branch
          %316 = sbr.rel (%p314) target = $region64
        $region63: #{_gru_gate.1} parent=43 // pred_region
          %317 = dma.done [#allocation9], 1024
        $region64: #{_gru_gate.1} parent=43 // pred_fallthru
          _
        %s318 = sand.u32 %s35, 1
        %s319 = scalar_lea.sflag [#allocation3], %s318
        %s320 = sand.u32 %s35, 1
        %s321 = smul.addr %s320, 8
        %s322 = scalar_lea.vmem [#allocation2], %s321
        %p323 = pneg %p48
        %p324 = pneg %p45
        %s325 = sand.u32 %s27, 1
        %s326 = scalar_lea.sflag [#allocation6], %s325
        %s327 = sand.u32 %s61, 1
        %s328 = smul.addr %s327, 8
        %s329 = scalar_lea.vmem [#allocation5], %s328
        %p330 = pneg %p74
        %p331 = pneg %p71
        %p332 = pneg %p95
        %p333 = pneg %p92
        %p334 = pneg %p116
        %p335 = pneg %p113
        %p336 = pneg %p137
        %p337 = pneg %p134
        %p338 = pneg %p158
        %p339 = pneg %p155
        %p340 = pneg %p184
        %p341 = pneg %p181
        %s342 = sand.u32 %s171, 1
        %s343 = scalar_lea.sflag [#allocation4], %s342
        %s344 = sand.u32 %s171, 1
        %s345 = smul.addr %s344, 8
        %s346 = scalar_lea.vmem [#allocation11], %s345
        %v348 = vld [vmem:[%s292] sm:$0xff]
        %v349 = vld [vmem:[%s301] sm:$0xff]
        %v350 = vpack.c.bf16 %v349, %v349
        %v351 = vpack.c.bf16 %v348, %v348
        %v352 = vld [vmem:[#allocation7] sm:$0xff]
        %v353 = vld [vmem:[#allocation7 + $0x8] sm:$0xff]
        %v354 = vld [vmem:[#allocation7 + $0x10] sm:$0xff]
        %v355 = vld [vmem:[#allocation7 + $0x18] sm:$0xff]
        %v356 = vld [vmem:[#allocation7 + $0x20] sm:$0xff]
        %v357 = vld [vmem:[#allocation7 + $0x28] sm:$0xff]
        %v358 = vld [vmem:[#allocation7 + $0x30] sm:$0xff]
        %v359 = vld [vmem:[#allocation7 + $0x38] sm:$0xff]
        %v360 = vld [vmem:[#allocation7 + $0x40] sm:$0xff]
        %v361 = vld [vmem:[#allocation7 + $0x48] sm:$0xff]
        %v362 = vld [vmem:[#allocation7 + $0x50] sm:$0xff]
        %v363 = vld [vmem:[#allocation7 + $0x58] sm:$0xff]
        %v364 = vld [vmem:[#allocation7 + $0x60] sm:$0xff]
        %v365 = vld [vmem:[#allocation7 + $0x68] sm:$0xff]
        %v366 = vld [vmem:[#allocation7 + $0x70] sm:$0xff]
        %v367 = vld [vmem:[#allocation7 + $0x78] sm:$0xff]
        %v368 = vld [vmem:[#allocation7 + $0x80] sm:$0xff]
        %v369 = vld [vmem:[#allocation7 + $0x88] sm:$0xff]
        %v370 = vld [vmem:[#allocation7 + $0x90] sm:$0xff]
        %v371 = vld [vmem:[#allocation7 + $0x98] sm:$0xff]
        %v372 = vld [vmem:[#allocation7 + $0xa0] sm:$0xff]
        %v373 = vld [vmem:[#allocation7 + $0xa8] sm:$0xff]
        %v374 = vld [vmem:[#allocation7 + $0xb0] sm:$0xff]
        %v375 = vld [vmem:[#allocation7 + $0xb8] sm:$0xff]
        %v376 = vld [vmem:[#allocation7 + $0xc0] sm:$0xff]
        %v377 = vld [vmem:[#allocation7 + $0xc8] sm:$0xff]
        %v378 = vld [vmem:[#allocation7 + $0xd0] sm:$0xff]
        %v379 = vld [vmem:[#allocation7 + $0xd8] sm:$0xff]
        %v380 = vld [vmem:[#allocation7 + $0xe0] sm:$0xff]
        %v381 = vld [vmem:[#allocation7 + $0xe8] sm:$0xff]
        %v382 = vld [vmem:[#allocation7 + $0xf0] sm:$0xff]
        %v383 = vld [vmem:[#allocation7 + $0xf8] sm:$0xff]
        %v416 = vunpack.c.l.b16 %v352
        %v417 = vunpack.c.h.b16 %v352
        %v418 = vunpack.c.l.b16 %v353
        %v419 = vunpack.c.h.b16 %v353
        %v420 = vunpack.c.l.b16 %v354
        %v421 = vunpack.c.h.b16 %v354
        %v422 = vunpack.c.l.b16 %v355
        %v423 = vunpack.c.h.b16 %v355
        %v424 = vunpack.c.l.b16 %v356
        %v425 = vunpack.c.h.b16 %v356
        %v426 = vunpack.c.l.b16 %v357
        %v427 = vunpack.c.h.b16 %v357
        %v428 = vunpack.c.l.b16 %v358
        %v429 = vunpack.c.h.b16 %v358
        %v430 = vunpack.c.l.b16 %v359
        %v431 = vunpack.c.h.b16 %v359
        %v432 = vunpack.c.l.b16 %v360
        %v433 = vunpack.c.h.b16 %v360
        %v434 = vunpack.c.l.b16 %v361
        %v435 = vunpack.c.h.b16 %v361
        %v436 = vunpack.c.l.b16 %v362
        %v437 = vunpack.c.h.b16 %v362
        %v438 = vunpack.c.l.b16 %v363
        %v439 = vunpack.c.h.b16 %v363
        %v440 = vunpack.c.l.b16 %v364
        %v441 = vunpack.c.h.b16 %v364
        %v442 = vunpack.c.l.b16 %v365
        %v443 = vunpack.c.h.b16 %v365
        %v444 = vunpack.c.l.b16 %v366
        %v445 = vunpack.c.h.b16 %v366
        %v446 = vunpack.c.l.b16 %v367
        %v447 = vunpack.c.h.b16 %v367
        %v448 = vunpack.c.l.b16 %v368
        %v449 = vunpack.c.h.b16 %v368
        %v450 = vunpack.c.l.b16 %v369
        %v451 = vunpack.c.h.b16 %v369
        %v452 = vunpack.c.l.b16 %v370
        %v453 = vunpack.c.h.b16 %v370
        %v454 = vunpack.c.l.b16 %v371
        %v455 = vunpack.c.h.b16 %v371
        %v456 = vunpack.c.l.b16 %v372
        %v457 = vunpack.c.h.b16 %v372
        %v458 = vunpack.c.l.b16 %v373
        %v459 = vunpack.c.h.b16 %v373
        %v460 = vunpack.c.l.b16 %v374
        %v461 = vunpack.c.h.b16 %v374
        %v462 = vunpack.c.l.b16 %v375
        %v463 = vunpack.c.h.b16 %v375
        %v464 = vunpack.c.l.b16 %v376
        %v465 = vunpack.c.h.b16 %v376
        %v466 = vunpack.c.l.b16 %v377
        %v467 = vunpack.c.h.b16 %v377
        %v468 = vunpack.c.l.b16 %v378
        %v469 = vunpack.c.h.b16 %v378
        %v470 = vunpack.c.l.b16 %v379
        %v471 = vunpack.c.h.b16 %v379
        %v472 = vunpack.c.l.b16 %v380
        %v473 = vunpack.c.h.b16 %v380
        %v474 = vunpack.c.l.b16 %v381
        %v475 = vunpack.c.h.b16 %v381
        %v476 = vunpack.c.l.b16 %v382
        %v477 = vunpack.c.h.b16 %v382
        %v478 = vunpack.c.l.b16 %v383
        %v479 = vunpack.c.h.b16 %v383
        %v480 = vpack.c.b16 %v418, %v416
        %v481 = vpack.c.b16 %v419, %v417
        %v482 = vpack.c.b16 %v422, %v420
        %v483 = vpack.c.b16 %v423, %v421
        %v484 = vpack.c.b16 %v426, %v424
        %v485 = vpack.c.b16 %v427, %v425
        %v486 = vpack.c.b16 %v430, %v428
        %v487 = vpack.c.b16 %v431, %v429
        %v488 = vpack.c.b16 %v434, %v432
        %v489 = vpack.c.b16 %v435, %v433
        %v490 = vpack.c.b16 %v438, %v436
        %v491 = vpack.c.b16 %v439, %v437
        %v492 = vpack.c.b16 %v442, %v440
        %v493 = vpack.c.b16 %v443, %v441
        %v494 = vpack.c.b16 %v446, %v444
        %v495 = vpack.c.b16 %v447, %v445
        %v496 = vpack.c.b16 %v450, %v448
        %v497 = vpack.c.b16 %v451, %v449
        %v498 = vpack.c.b16 %v454, %v452
        %v499 = vpack.c.b16 %v455, %v453
        %v500 = vpack.c.b16 %v458, %v456
        %v501 = vpack.c.b16 %v459, %v457
        %v502 = vpack.c.b16 %v462, %v460
        %v503 = vpack.c.b16 %v463, %v461
        %v504 = vpack.c.b16 %v466, %v464
        %v505 = vpack.c.b16 %v467, %v465
        %v506 = vpack.c.b16 %v470, %v468
        %v507 = vpack.c.b16 %v471, %v469
        %v508 = vpack.c.b16 %v474, %v472
        %v509 = vpack.c.b16 %v475, %v473
        %v510 = vpack.c.b16 %v478, %v476
        %v511 = vpack.c.b16 %v479, %v477
        %544 = vmatprep.subr.bf16.mxu0 %v481
        %545 = vmatpush1.bf16.msra.mxu0 %v480
        %546 = vmatprep.subr.bf16.mxu0 %v483
        %547 = vmatpush1.bf16.msra.mxu0 %v482
        %548 = vmatprep.subr.bf16.mxu0 %v485
        %549 = vmatpush1.bf16.msra.mxu0 %v484
        %550 = vmatprep.subr.bf16.mxu0 %v487
        %551 = vmatpush1.bf16.msra.mxu0 %v486
        %552 = vmatprep.subr.bf16.mxu0 %v489
        %553 = vmatpush1.bf16.msra.mxu0 %v488
        %554 = vmatprep.subr.bf16.mxu0 %v491
        %555 = vmatpush1.bf16.msra.mxu0 %v490
        %556 = vmatprep.subr.bf16.mxu0 %v493
        %557 = vmatpush1.bf16.msra.mxu0 %v492
        %558 = vmatprep.subr.bf16.mxu0 %v495
        %559 = vmatpush1.bf16.msra.mxu0 %v494
        %560 = vmatprep.subr.bf16.mxu0 %v497
        %561 = vmatpush1.bf16.msra.mxu0 %v496
        %562 = vmatprep.subr.bf16.mxu0 %v499
        %563 = vmatpush1.bf16.msra.mxu0 %v498
        %564 = vmatprep.subr.bf16.mxu0 %v501
        %565 = vmatpush1.bf16.msra.mxu0 %v500
        %566 = vmatprep.subr.bf16.mxu0 %v503
        %567 = vmatpush1.bf16.msra.mxu0 %v502
        %568 = vmatprep.subr.bf16.mxu0 %v505
        %569 = vmatpush1.bf16.msra.mxu0 %v504
        %570 = vmatprep.subr.bf16.mxu0 %v507
        %571 = vmatpush1.bf16.msra.mxu0 %v506
        %572 = vmatprep.subr.bf16.mxu0 %v509
        %573 = vmatpush1.bf16.msra.mxu0 %v508
        %574 = vmatprep.subr.bf16.mxu0 %v511
        %575 = vmatpush1.bf16.msra.mxu0 %v510
        %576 = vmatprep.mubr.bf16.mxu0 %v351
        %577 = vmatmul.mubr.bf16.gmra.mrb[0].mxu0 %v350
        %v578 = vpop.f32.mrb[0].mxu0
        %v579 = vadd.f32 0.0, %v578
        %v580 = vpop.f32.mrb[0].mxu0
        %v581 = vadd.f32 0.0, %v580
        %v582 = vpop.f32.mrb[0].mxu0
        %v583 = vpop.f32.mrb[0].mxu0
        %584 = vdwg.mxu0
        %v585 = vld [vmem:[%s5] sm:$0x1]
        %v587 = vlaneseq
        %v588 = vshrl.u32 %v587, 7
        %v589 = vsub.s32 0, %v588
        %v590 = vrot.slane %v585, %v589
        %v592 = vadd.f32 %v579, %v590
        %v593 = vxor.u32 %v592, 2147483648
        %v594 = vmul.f32 %v593, 1.442695
        %v595 = vpow.pop %v594
        %v596 = vadd.f32 %v595, 1.0
        %v597 = vrcp.pop %v596
        %v598 = vmul.f32 1.0, %v597
        %v599 = vxor.u32 %v581, 2147483648
        %v600 = vmul.f32 %v599, 1.442695
        %v601 = vpow.pop %v600
        %v602 = vadd.f32 %v601, 1.0
        %v603 = vrcp.pop %v602
        %v604 = vmul.f32 1.0, %v603
        %v605 = vld [vmem:[#allocation8] sm:$0xf]
        %v606 = vld [vmem:[#allocation8 + $0x4] sm:$0xf]
        %v607 = vld [vmem:[#allocation8 + $0x8] sm:$0xf]
        %v608 = vld [vmem:[#allocation8 + $0xc] sm:$0xf]
        %v609 = vld [vmem:[#allocation8 + $0x10] sm:$0xf]
        %v610 = vld [vmem:[#allocation8 + $0x14] sm:$0xf]
        %v611 = vld [vmem:[#allocation8 + $0x18] sm:$0xf]
        %v612 = vld [vmem:[#allocation8 + $0x1c] sm:$0xf]
        %v613 = vld [vmem:[#allocation8 + $0x20] sm:$0xf]
        %v614 = vld [vmem:[#allocation8 + $0x24] sm:$0xf]
        %v615 = vld [vmem:[#allocation8 + $0x28] sm:$0xf]
        %v616 = vld [vmem:[#allocation8 + $0x2c] sm:$0xf]
        %v617 = vld [vmem:[#allocation8 + $0x30] sm:$0xf]
        %v618 = vld [vmem:[#allocation8 + $0x34] sm:$0xf]
        %v619 = vld [vmem:[#allocation8 + $0x38] sm:$0xf]
        %v620 = vld [vmem:[#allocation8 + $0x3c] sm:$0xf]
        %v621 = vmul.f32 %v604, %v348
        %v622 = vpack.c.bf16 %v621, %v621
        %v623 = vld [vmem:[#allocation10] sm:$0xf]
        %v624 = vld [vmem:[#allocation10 + $0x4] sm:$0xf]
        %v625 = vld [vmem:[#allocation10 + $0x8] sm:$0xf]
        %v626 = vld [vmem:[#allocation10 + $0xc] sm:$0xf]
        %v627 = vld [vmem:[#allocation10 + $0x10] sm:$0xf]
        %v628 = vld [vmem:[#allocation10 + $0x14] sm:$0xf]
        %v629 = vld [vmem:[#allocation10 + $0x18] sm:$0xf]
        %v630 = vld [vmem:[#allocation10 + $0x1c] sm:$0xf]
        %v631 = vld [vmem:[#allocation10 + $0x20] sm:$0xf]
        %v632 = vld [vmem:[#allocation10 + $0x24] sm:$0xf]
        %v633 = vld [vmem:[#allocation10 + $0x28] sm:$0xf]
        %v634 = vld [vmem:[#allocation10 + $0x2c] sm:$0xf]
        %v635 = vld [vmem:[#allocation10 + $0x30] sm:$0xf]
        %v636 = vld [vmem:[#allocation10 + $0x34] sm:$0xf]
        %v637 = vld [vmem:[#allocation10 + $0x38] sm:$0xf]
        %v638 = vld [vmem:[#allocation10 + $0x3c] sm:$0xf]
        %v655 = vunpack.c.l.b16 %v623
        %v656 = vunpack.c.l.b16 %v624
        %v657 = vunpack.c.l.b16 %v625
        %v658 = vunpack.c.l.b16 %v626
        %v659 = vunpack.c.l.b16 %v627
        %v660 = vunpack.c.l.b16 %v628
        %v661 = vunpack.c.l.b16 %v629
        %v662 = vunpack.c.l.b16 %v630
        %v663 = vunpack.c.l.b16 %v631
        %v664 = vunpack.c.l.b16 %v632
        %v665 = vunpack.c.l.b16 %v633
        %v666 = vunpack.c.l.b16 %v634
        %v667 = vunpack.c.l.b16 %v635
        %v668 = vunpack.c.l.b16 %v636
        %v669 = vunpack.c.l.b16 %v637
        %v670 = vunpack.c.l.b16 %v638
        %v671 = vpack.c.b16 %v656, %v655
        %v672 = vpack.c.b16 %v658, %v657
        %v673 = vpack.c.b16 %v660, %v659
        %v674 = vpack.c.b16 %v662, %v661
        %v675 = vpack.c.b16 %v664, %v663
        %v676 = vpack.c.b16 %v666, %v665
        %v677 = vpack.c.b16 %v668, %v667
        %v678 = vpack.c.b16 %v670, %v669
        %687 = vmatprep.subr.bf16.mxu0 0
        %688 = vmatpush1.bf16.msra.mxu0 %v671
        %689 = vmatprep.subr.bf16.mxu0 0
        %690 = vmatpush1.bf16.msra.mxu0 %v672
        %691 = vmatprep.subr.bf16.mxu0 0
        %692 = vmatpush1.bf16.msra.mxu0 %v673
        %693 = vmatprep.subr.bf16.mxu0 0
        %694 = vmatpush1.bf16.msra.mxu0 %v674
        %695 = vmatprep.subr.bf16.mxu0 0
        %696 = vmatpush1.bf16.msra.mxu0 %v675
        %697 = vmatprep.subr.bf16.mxu0 0
        %698 = vmatpush1.bf16.msra.mxu0 %v676
        %699 = vmatprep.subr.bf16.mxu0 0
        %700 = vmatpush1.bf16.msra.mxu0 %v677
        %701 = vmatprep.subr.bf16.mxu0 0
        %702 = vmatpush1.bf16.msra.mxu0 %v678
        %703 = vmatprep.subr.bf16.mxu0 0
        %704 = vmatpush1.bf16.msra.mxu0 0
        %705 = vmatprep.subr.bf16.mxu0 0
        %706 = vmatpush1.bf16.msra.mxu0 0
        %707 = vmatprep.subr.bf16.mxu0 0
        %708 = vmatpush1.bf16.msra.mxu0 0
        %709 = vmatprep.subr.bf16.mxu0 0
        %710 = vmatpush1.bf16.msra.mxu0 0
        %711 = vmatprep.subr.bf16.mxu0 0
        %712 = vmatpush1.bf16.msra.mxu0 0
        %713 = vmatprep.subr.bf16.mxu0 0
        %714 = vmatpush1.bf16.msra.mxu0 0
        %715 = vmatprep.subr.bf16.mxu0 0
        %716 = vmatpush1.bf16.msra.mxu0 0
        %717 = vmatprep.subr.bf16.mxu0 0
        %718 = vmatpush1.bf16.msra.mxu0 0
        %719 = vmatprep.mubr.bf16.mxu0 0
        %720 = vmatmul.mubr.bf16.gmra.mrb[0].mxu0 %v622
        %v721 = vpop.f32.mrb[0].mxu0
        %v722 = vadd.f32 0.0, %v721
        %v723 = vpop.f32.mrb[0].mxu0
        %v724 = vpop.f32.mrb[0].mxu0
        %v725 = vpop.f32.mrb[0].mxu0
        %726 = vdwg.mxu0
        %v743 = vunpack.c.l.b16 %v605
        %v744 = vunpack.c.l.b16 %v606
        %v745 = vunpack.c.l.b16 %v607
        %v746 = vunpack.c.l.b16 %v608
        %v747 = vunpack.c.l.b16 %v609
        %v748 = vunpack.c.l.b16 %v610
        %v749 = vunpack.c.l.b16 %v611
        %v750 = vunpack.c.l.b16 %v612
        %v751 = vunpack.c.l.b16 %v613
        %v752 = vunpack.c.l.b16 %v614
        %v753 = vunpack.c.l.b16 %v615
        %v754 = vunpack.c.l.b16 %v616
        %v755 = vunpack.c.l.b16 %v617
        %v756 = vunpack.c.l.b16 %v618
        %v757 = vunpack.c.l.b16 %v619
        %v758 = vunpack.c.l.b16 %v620
        %v759 = vpack.c.b16 %v744, %v743
        %v760 = vpack.c.b16 %v746, %v745
        %v761 = vpack.c.b16 %v748, %v747
        %v762 = vpack.c.b16 %v750, %v749
        %v763 = vpack.c.b16 %v752, %v751
        %v764 = vpack.c.b16 %v754, %v753
        %v765 = vpack.c.b16 %v756, %v755
        %v766 = vpack.c.b16 %v758, %v757
        %775 = vmatprep.subr.bf16.mxu0 0
        %776 = vmatpush1.bf16.msra.mxu0 %v759
        %777 = vmatprep.subr.bf16.mxu0 0
        %778 = vmatpush1.bf16.msra.mxu0 %v760
        %779 = vmatprep.subr.bf16.mxu0 0
        %780 = vmatpush1.bf16.msra.mxu0 %v761
        %781 = vmatprep.subr.bf16.mxu0 0
        %782 = vmatpush1.bf16.msra.mxu0 %v762
        %783 = vmatprep.subr.bf16.mxu0 0
        %784 = vmatpush1.bf16.msra.mxu0 %v763
        %785 = vmatprep.subr.bf16.mxu0 0
        %786 = vmatpush1.bf16.msra.mxu0 %v764
        %787 = vmatprep.subr.bf16.mxu0 0
        %788 = vmatpush1.bf16.msra.mxu0 %v765
        %789 = vmatprep.subr.bf16.mxu0 0
        %790 = vmatpush1.bf16.msra.mxu0 %v766
        %791 = vmatprep.subr.bf16.mxu0 0
        %792 = vmatpush1.bf16.msra.mxu0 0
        %793 = vmatprep.subr.bf16.mxu0 0
        %794 = vmatpush1.bf16.msra.mxu0 0
        %795 = vmatprep.subr.bf16.mxu0 0
        %796 = vmatpush1.bf16.msra.mxu0 0
        %797 = vmatprep.subr.bf16.mxu0 0
        %798 = vmatpush1.bf16.msra.mxu0 0
        %799 = vmatprep.subr.bf16.mxu0 0
        %800 = vmatpush1.bf16.msra.mxu0 0
        %801 = vmatprep.subr.bf16.mxu0 0
        %802 = vmatpush1.bf16.msra.mxu0 0
        %803 = vmatprep.subr.bf16.mxu0 0
        %804 = vmatpush1.bf16.msra.mxu0 0
        %805 = vmatprep.subr.bf16.mxu0 0
        %806 = vmatpush1.bf16.msra.mxu0 0
        %807 = vmatprep.mubr.bf16.mxu0 0
        %808 = vmatmul.mubr.bf16.gmra.mrb[0].mxu0 %v350
        %v809 = vpop.f32.mrb[0].mxu0
        %v810 = vadd.f32 %v722, %v809
        %v811 = vpop.f32.mrb[0].mxu0
        %v812 = vpop.f32.mrb[0].mxu0
        %v813 = vpop.f32.mrb[0].mxu0
        %814 = vdwg.mxu0
        %v815 = vtanh.pop %v810
        %v816 = vsub.f32 1.0, %v598
        %v817 = vmul.f32 %v816, %v348
        %v818 = vmul.f32 %v598, %v815
        %v819 = vadd.f32 %v817, %v818
        %820 = vst [vmem:[%s346] sm:$0xff] %v819
        %s821 = sand.u32 %s171, 1
        %s822 = scalar_lea.sflag [#allocation4], %s821
        %s823 = sand.u32 %s171, 1
        %s824 = smul.addr %s823, 8
        %s825 = scalar_lea.vmem [#allocation11], %s824
        // Predicated region
        $region65: #{_gru_gate.1} parent=43 // pred_check
          %p826 = pneg %p181
        $region66: #{_gru_gate.1} parent=43 // pred_check_branch
          %828 = sbr.rel (%p826) target = $region68
        $region67: #{_gru_gate.1} parent=43 // pred_region
          %s830 = ssub.s32 128, 128
          %831 = vsyncadd %s822, %s830
          %s832 = smul.addr %s27, 128
          %s833 = scalar_lea.hbm %s6, %s832
          %s835 = sshll.u32 %s825, 4
          %s836 = int_to_ptr.vmem [resolvable:$true] %s835
          %838 = dma.vmem_to_hbm [thread:$0]  %s836, 128, %s833, %s822
        $region68: #{_gru_gate.1} parent=43 // pred_fallthru
          _
      $region44: #{_gru_gate.1} parent=5 // pred_fallthru
        _
      %p839 = scmp.le.s32.totalorder 2, %s22
      // Predicated region
      $region69: #{_gru_gate.1} parent=5 // pred_check
        %p840 = pneg %p839
      $region70: #{_gru_gate.1} parent=5 // pred_check_branch
        %842 = sbr.rel (%p840) target = $region72
      $region71: #{_gru_gate.1} parent=5 // pred_region
        %s843 = ssub.s32 %s22, 2
        // Predicated region
        $region73: #{_gru_gate.1} parent=71 // pred_check
          %p844 = pneg %p187
        $region74: #{_gru_gate.1} parent=71 // pred_check_branch
          %846 = sbr.rel (%p844) target = $region76
        $region75: #{_gru_gate.1} parent=71 // pred_region
          %s847 = sand.u32 %s172, 1
          %s848 = scalar_lea.sflag [#allocation4], %s847
          %s849 = sand.u32 %s172, 1
          %s850 = smul.addr %s849, 8
          %s851 = scalar_lea.vmem [#allocation11], %s850
          %852 = dma.done %s848, 128
        $region76: #{_gru_gate.1} parent=71 // pred_fallthru
          _
      $region72: #{_gru_gate.1} parent=5 // pred_fallthru
        _
    $region6: #{_gru_gate.1} parent=1 // loop_footer
      %s26 = sadd.s32 1, %s22
    $region7: #{_gru_gate.1} parent=1 // loop_footer_branch
      %21 = sbr.rel target = $region3
    $region8: #{_gru_gate.1} parent=1 // loop_exit
      _
    %853 = vsyncpa [#allocation3], 1
    %s854 = scalar_lea.sflag [#allocation3], 1
    %855 = vsyncpa %s854, 1
    %856 = vsyncpa [#allocation6], 1
    %s857 = scalar_lea.sflag [#allocation6], 1
    %858 = vsyncpa %s857, 1
    %859 = vsyncpa [#allocation9], 1
    %860 = vsyncpa [#allocation4], 1
    %s861 = scalar_lea.sflag [#allocation4], 1
    %862 = vsyncpa %s861, 1

// kernel: _gru_gate.1
$region0: #{_gru_gate.1}
  #allocation0 [shape = 'u32[]', space=smem, size = 0x4, offset = 0x4, fixed_abs, tag = 'smem constant byte address 0x4 - core index']
  #allocation1 [shape = 'u32[144,128]{1,0:T(1,128)}', space=vmem, size = 0x12000, scoped, tag = 'internal scratch']
  %s0 = inlined_call_operand.hbm [shape: f32[16,128], index: 0, kind: input, shape index: {}]
  %s1 = inlined_call_operand.hbm [shape: f32[16,128], index: 1, kind: input, shape index: {}]
  %s2 = inlined_call_operand.hbm [shape: bf16[256,256], index: 2, kind: input, shape index: {}]
  %s3 = inlined_call_operand.hbm [shape: bf16[128,128], index: 3, kind: input, shape index: {}]
  %s4 = inlined_call_operand.hbm [shape: bf16[128,128], index: 4, kind: input, shape index: {}]
  %s5 = inlined_call_operand.vmem [shape: f32[1,128], index: 5, kind: input, shape index: {}]
  %s6 = inlined_call_operand.hbm [shape: f32[16,128], index: 6, kind: output, shape index: {}]
  %s7 = sld [smem:[#allocation0]]
  $region77: #{_gru_gate.1} parent=0
    _
  %s9 = ssub.s32 1, %s7
  %s10 = scalar_select 0, %s9, %s7
  $region1: #{_gru_gate.1} parent=0
    #allocation2 [shape = 'u8[8192]{0}', space=vmem, size = 0x2000, scoped, tag = 'input window, operand 0']
    #allocation3 [shape = 's32[2]{0}', space=sflag, size = 0x8, scoped, tag = 'scoped memory for _gru_gate.1']
    #allocation4 [shape = 's32[2]{0}', space=sflag, size = 0x8, scoped, tag = 'scoped memory for _gru_gate.1']
    #allocation5 [shape = 'u8[8192]{0}', space=vmem, size = 0x2000, scoped, tag = 'input window, operand 1']
    #allocation6 [shape = 's32[2]{0}', space=sflag, size = 0x8, scoped, tag = 'scoped memory for _gru_gate.1']
    #allocation7 [shape = 'u8[131072]{0}', space=vmem, size = 0x20000, scoped, tag = 'input window, operand 2, single buffered']
    #allocation8 [shape = 'u8[32768]{0}', space=vmem, size = 0x8000, scoped, tag = 'input window, operand 3, single buffered']
    #allocation9 [shape = 's32[1]{0}', space=sflag, size = 0x4, scoped, tag = 'scoped memory for _gru_gate.1']
    #allocation10 [shape = 'u8[32768]{0}', space=vmem, size = 0x8000, scoped, tag = 'input window, operand 4, single buffered']
    #allocation11 [shape = 'u8[8192]{0}', space=vmem, size = 0x2000, scoped, tag = 'output window, operand 0']
    %11 = vsyncpa [#allocation3], 0
    %s12 = scalar_lea.sflag [#allocation3], 1
    %13 = vsyncpa %s12, 0
    %14 = vsyncpa [#allocation6], 0
    %s15 = scalar_lea.sflag [#allocation6], 1
    %16 = vsyncpa %s15, 0
    %17 = vsyncpa [#allocation9], 0
    %18 = vsyncpa [#allocation4], 0
    %s19 = scalar_lea.sflag [#allocation4], 1
    %20 = vsyncpa %s19, 0
    loop: start=0, step=1, limit=4
    $region2: #{_gru_gate.1} parent=1 // loop_pre_header
      _
    $region3: #{_gru_gate.1} parent=1 // loop_header
      %s22 = sphi 0, %s26
      %p23 = scmp.ge.s32.totalorder %s22, 4
      %s32 = sphi 0, %s34
      %s35 = sphi 0, %s32
      %s36 = sphi 0, %s35
      %s52 = sphi 0, %s36
      %s58 = sphi 0, %s60
      %s61 = sphi 0, %s58
      %s62 = sphi 0, %s61
      %s78 = sphi 0, %s62
      %s82 = sphi 0, %s82
      %s84 = sphi 0, %s82
      %s85 = sphi 0, %s84
      %s99 = sphi 0, %s85
      %s103 = sphi 0, %s103
      %s105 = sphi 0, %s103
      %s106 = sphi 0, %s105
      %s120 = sphi 0, %s106
      %s124 = sphi 0, %s124
      %s126 = sphi 0, %s124
      %s127 = sphi 0, %s126
      %s141 = sphi 0, %s127
      %s145 = sphi 0, %s145
      %s147 = sphi 0, %s145
      %s148 = sphi 0, %s147
      %s162 = sphi 0, %s148
      %s168 = sphi 0, %s170
      %s171 = sphi 0, %s168
      %s172 = sphi 0, %s171
      %s188 = sphi 0, %s172
    $region4: #{_gru_gate.1} parent=1 // loop_header_branch
      %25 = sbr.rel (%p23) target = $region8
    $region5: #{_gru_gate.1} parent=1 // loop_body
      %s27 = ssub.s32 %s22, 1
      %s28 = ssub.s32 %s22, 2
      %s29 = sadd.s32 %s22, 1
      %s30 = ssub.s32 %s22, %s29
      %p31 = scmp.eq.s32.totalorder %s30, 0
      %s33 = sadd.s32 %s32, 1
      %s34 = scalar_select %p31, %s32, %s33
      %p37 = pneg %p31
      %p38 = scmp.eq.s32.totalorder %s22, 1
      %p39 = por %p37, %p38
      %p40 = scmp.ne.s32.totalorder %s32, %s35
      %p41 = scmp.eq.s32.totalorder %s22, 0
      %p42 = por %p40, %p41
      %p43 = scmp.ne.s32.totalorder %s32, %s35
      %p44 = scmp.eq.s32.totalorder %s27, 1
      %p45 = por %p43, %p44
      %p46 = scmp.ne.s32.totalorder %s35, %s36
      %p47 = scmp.eq.s32.totalorder %s27, 0
      %p48 = por %p46, %p47
      %p49 = scmp.ne.s32.totalorder %s35, %s36
      %p50 = scmp.eq.s32.totalorder %s28, 1
      %p51 = por %p49, %p50
      %p53 = scmp.ne.s32.totalorder %s36, %s52
      %p54 = scmp.eq.s32.totalorder %s28, 0
      %p55 = por %p53, %p54
      %s56 = ssub.s32 %s22, %s29
      %p57 = scmp.eq.s32.totalorder %s56, 0
      %s59 = sadd.s32 %s58, 1
      %s60 = scalar_select %p57, %s58, %s59
      %p63 = pneg %p57
      %p64 = scmp.eq.s32.totalorder %s22, 1
      %p65 = por %p63, %p64
      %p66 = scmp.ne.s32.totalorder %s58, %s61
      %p67 = scmp.eq.s32.totalorder %s22, 0
      %p68 = por %p66, %p67
      %p69 = scmp.ne.s32.totalorder %s58, %s61
      %p70 = scmp.eq.s32.totalorder %s27, 1
      %p71 = por %p69, %p70
      %p72 = scmp.ne.s32.totalorder %s61, %s62
      %p73 = scmp.eq.s32.totalorder %s27, 0
      %p74 = por %p72, %p73
      %p75 = scmp.ne.s32.totalorder %s61, %s62
      %p76 = scmp.eq.s32.totalorder %s28, 1
      %p77 = por %p75, %p76
      %p79 = scmp.ne.s32.totalorder %s62, %s78
      %p80 = scmp.eq.s32.totalorder %s28, 0
      %p81 = por %p79, %p80
      %s83 = sadd.s32 %s82, 1
      %p86 = scmp.eq.s32.totalorder %s22, 1
      %p87 = scmp.ne.s32.totalorder %s82, %s84
      %p88 = scmp.eq.s32.totalorder %s22, 0
      %p89 = por %p87, %p88
      %p90 = scmp.ne.s32.totalorder %s82, %s84
      %p91 = scmp.eq.s32.totalorder %s27, 1
      %p92 = por %p90, %p91
      %p93 = scmp.ne.s32.totalorder %s84, %s85
      %p94 = scmp.eq.s32.totalorder %s27, 0
      %p95 = por %p93, %p94
      %p96 = scmp.ne.s32.totalorder %s84, %s85
      %p97 = scmp.eq.s32.totalorder %s28, 1
      %p98 = por %p96, %p97
      %p100 = scmp.ne.s32.totalorder %s85, %s99
      %p101 = scmp.eq.s32.totalorder %s28, 0
      %p102 = por %p100, %p101
      %s104 = sadd.s32 %s103, 1
      %p107 = scmp.eq.s32.totalorder %s22, 1
      %p108 = scmp.ne.s32.totalorder %s103, %s105
      %p109 = scmp.eq.s32.totalorder %s22, 0
      %p110 = por %p108, %p109
      %p111 = scmp.ne.s32.totalorder %s103, %s105
      %p112 = scmp.eq.s32.totalorder %s27, 1
      %p113 = por %p111, %p112
      %p114 = scmp.ne.s32.totalorder %s105, %s106
      %p115 = scmp.eq.s32.totalorder %s27, 0
      %p116 = por %p114, %p115
      %p117 = scmp.ne.s32.totalorder %s105, %s106
      %p118 = scmp.eq.s32.totalorder %s28, 1
      %p119 = por %p117, %p118
      %p121 = scmp.ne.s32.totalorder %s106, %s120
      %p122 = scmp.eq.s32.totalorder %s28, 0
      %p123 = por %p121, %p122
      %s125 = sadd.s32 %s124, 1
      %p128 = scmp.eq.s32.totalorder %s22, 1
      %p129 = scmp.ne.s32.totalorder %s124, %s126
      %p130 = scmp.eq.s32.totalorder %s22, 0
      %p131 = por %p129, %p130
      %p132 = scmp.ne.s32.totalorder %s124, %s126
      %p133 = scmp.eq.s32.totalorder %s27, 1
      %p134 = por %p132, %p133
      %p135 = scmp.ne.s32.totalorder %s126, %s127
      %p136 = scmp.eq.s32.totalorder %s27, 0
      %p137 = por %p135, %p136
      %p138 = scmp.ne.s32.totalorder %s126, %s127
      %p139 = scmp.eq.s32.totalorder %s28, 1
      %p140 = por %p138, %p139
      %p142 = scmp.ne.s32.totalorder %s127, %s141
      %p143 = scmp.eq.s32.totalorder %s28, 0
      %p144 = por %p142, %p143
      %s146 = sadd.s32 %s145, 1
      %p149 = scmp.eq.s32.totalorder %s22, 1
      %p150 = scmp.ne.s32.totalorder %s145, %s147
      %p151 = scmp.eq.s32.totalorder %s22, 0
      %p152 = por %p150, %p151
      %p153 = scmp.ne.s32.totalorder %s145, %s147
      %p154 = scmp.eq.s32.totalorder %s27, 1
      %p155 = por %p153, %p154
      %p156 = scmp.ne.s32.totalorder %s147, %s148
      %p157 = scmp.eq.s32.totalorder %s27, 0
      %p158 = por %p156, %p157
      %p159 = scmp.ne.s32.totalorder %s147, %s148
      %p160 = scmp.eq.s32.totalorder %s28, 1
      %p161 = por %p159, %p160
      %p163 = scmp.ne.s32.totalorder %s148, %s162
      %p164 = scmp.eq.s32.totalorder %s28, 0
      %p165 = por %p163, %p164
      %s166 = ssub.s32 %s22, %s29
      %p167 = scmp.eq.s32.totalorder %s166, 0
      %s169 = sadd.s32 %s168, 1
      %s170 = scalar_select %p167, %s168, %s169
      %p173 = pneg %p167
      %p174 = scmp.eq.s32.totalorder %s22, 1
      %p175 = por %p173, %p174
      %p176 = scmp.ne.s32.totalorder %s168, %s171
      %p177 = scmp.eq.s32.totalorder %s22, 0
      %p178 = por %p176, %p177
      %p179 = scmp.ne.s32.totalorder %s168, %s171
      %p180 = scmp.eq.s32.totalorder %s27, 1
      %p181 = por %p179, %p180
      %p182 = scmp.ne.s32.totalorder %s171, %s172
      %p183 = scmp.eq.s32.totalorder %s27, 0
      %p184 = por %p182, %p183
      %p185 = scmp.ne.s32.totalorder %s171, %s172
      %p186 = scmp.eq.s32.totalorder %s28, 1
      %p187 = por %p185, %p186
      %p189 = scmp.ne.s32.totalorder %s172, %s188
      %p190 = scmp.eq.s32.totalorder %s28, 0
      %p191 = por %p189, %p190
      %p192 = scmp.le.s32.totalorder 1, %s22
      %p193 = scmp.lt.s32.totalorder %s22, 3
      %p194 = pnand %p192, %p193
      %p195 = pneg %p194
      // Predicated region
      $region9: #{_gru_gate.1} parent=5 // pred_check
        _
      $region10: #{_gru_gate.1} parent=5 // pred_check_branch
        %197 = sbr.rel (%p194) target = $region12
      $region11: #{_gru_gate.1} parent=5 // pred_region
        %s198 = ssub.s32 %s22, 1
        // Predicated region
        $region13: #{_gru_gate.1} parent=11 // pred_check
          %p199 = pneg %p95
        $region14: #{_gru_gate.1} parent=11 // pred_check_branch
          %201 = sbr.rel (%p199) target = $region16
        $region15: #{_gru_gate.1} parent=11 // pred_region
          %s203 = ssub.s32 4096, 4096
          %204 = vsyncadd [#allocation6], %s203
          %s205 = sshll.u32 [#allocation7], 4
          %s206 = int_to_ptr.vmem [resolvable:$true] %s205
          %211 = dma.hbm_to_vmem [thread:$0]  %s2, 4096, %s206, [#allocation6], 128, 128, 8
        $region16: #{_gru_gate.1} parent=11 // pred_fallthru
          _
        // Predicated region
        $region17: #{_gru_gate.1} parent=11 // pred_check
          %p212 = pneg %p116
        $region18: #{_gru_gate.1} parent=11 // pred_check_branch
          %214 = sbr.rel (%p212) target = $region20
        $region19: #{_gru_gate.1} parent=11 // pred_region
          %s216 = ssub.s32 1024, 1024
          %217 = vsyncadd [#allocation9], %s216
          %s218 = sshll.u32 [#allocation8], 4
          %s219 = int_to_ptr.vmem [resolvable:$true] %s218
          %224 = dma.hbm_to_vmem [thread:$0]  %s3, 1024, %s219, [#allocation9], 64, 64, 4
        $region20: #{_gru_gate.1} parent=11 // pred_fallthru
          _
        // Predicated region
        $region21: #{_gru_gate.1} parent=11 // pred_check
          %p225 = pneg %p137
        $region22: #{_gru_gate.1} parent=11 // pred_check_branch
          %227 = sbr.rel (%p225) target = $region24
        $region23: #{_gru_gate.1} parent=11 // pred_region
          %s229 = ssub.s32 1024, 1024
          %230 = vsyncadd [#allocation9], %s229
          %s231 = sshll.u32 [#allocation10], 4
          %s232 = int_to_ptr.vmem [resolvable:$true] %s231
          %237 = dma.hbm_to_vmem [thread:$0]  %s4, 1024, %s232, [#allocation9], 64, 64, 4
        $region24: #{_gru_gate.1} parent=11 // pred_fallthru
          _
        // Predicated region
        $region25: #{_gru_gate.1} parent=11 // pred_check
          %p238 = pneg %p158
        $region26: #{_gru_gate.1} parent=11 // pred_check_branch
          %240 = sbr.rel (%p238) target = $region28
        $region27: #{_gru_gate.1} parent=11 // pred_region
          _
        $region28: #{_gru_gate.1} parent=11 // pred_fallthru
          _
      $region12: #{_gru_gate.1} parent=5 // pred_fallthru
        _
      %p241 = scmp.lt.s32.totalorder %s22, 2
      // Predicated region
      $region29: #{_gru_gate.1} parent=5 // pred_check
        %p242 = pneg %p241
      $region30: #{_gru_gate.1} parent=5 // pred_check_branch
        %244 = sbr.rel (%p242) target = $region32
      $region31: #{_gru_gate.1} parent=5 // pred_region
        // Predicated region
        $region33: #{_gru_gate.1} parent=31 // pred_check
          %p245 = pneg %p42
        $region34: #{_gru_gate.1} parent=31 // pred_check_branch
          %247 = sbr.rel (%p245) target = $region36
        $region35: #{_gru_gate.1} parent=31 // pred_region
          %s248 = sand.u32 %s32, 1
          %s249 = scalar_lea.sflag [#allocation3], %s248
          %s250 = sand.u32 %s32, 1
          %s251 = smul.addr %s250, 8
          %s252 = scalar_lea.vmem [#allocation2], %s251
          %s254 = ssub.s32 128, 128
          %255 = vsyncadd %s249, %s254
          %s256 = smul.addr %s22, 128
          %s257 = scalar_lea.hbm %s0, %s256
          %s259 = sshll.u32 %s252, 4
          %s260 = int_to_ptr.vmem [resolvable:$true] %s259
          %262 = dma.hbm_to_vmem [thread:$0]  %s257, 128, %s260, %s249
        $region36: #{_gru_gate.1} parent=31 // pred_fallthru
          _
        // Predicated region
        $region37: #{_gru_gate.1} parent=31 // pred_check
          %p263 = pneg %p68
        $region38: #{_gru_gate.1} parent=31 // pred_check_branch
          %265 = sbr.rel (%p263) target = $region40
        $region39: #{_gru_gate.1} parent=31 // pred_region
          %s266 = sand.u32 %s22, 1
          %s267 = scalar_lea.sflag [#allocation6], %s266
          %s268 = sand.u32 %s58, 1
          %s269 = smul.addr %s268, 8
          %s270 = scalar_lea.vmem [#allocation5], %s269
          %s272 = ssub.s32 128, 128
          %273 = vsyncadd %s267, %s272
          %s274 = smul.addr %s22, 128
          %s275 = scalar_lea.hbm %s1, %s274
          %s277 = sshll.u32 %s270, 4
          %s278 = int_to_ptr.vmem [resolvable:$true] %s277
          %280 = dma.hbm_to_vmem [thread:$0]  %s275, 128, %s278, %s267
        $region40: #{_gru_gate.1} parent=31 // pred_fallthru
          _
      $region32: #{_gru_gate.1} parent=5 // pred_fallthru
        _
      %p281 = scmp.le.s32.totalorder 1, %s22
      %p282 = scmp.lt.s32.totalorder %s22, 3
      %p283 = pnand %p281, %p282
      %p284 = pneg %p283
      // Predicated region
      $region41: #{_gru_gate.1} parent=5 // pred_check
        _
      $region42: #{_gru_gate.1} parent=5 // pred_check_branch
        %286 = sbr.rel (%p283) target = $region44
      $region43: #{_gru_gate.1} parent=5 // pred_region
        %s287 = ssub.s32 %s22, 1
        %s288 = sand.u32 %s35, 1
        %s289 = scalar_lea.sflag [#allocation3], %s288
        %s290 = sand.u32 %s35, 1
        %s291 = smul.addr %s290, 8
        %s292 = scalar_lea.vmem [#allocation2], %s291
        // Predicated region
        $region45: #{_gru_gate.1} parent=43 // pred_check
          %p293 = pneg %p48
        $region46: #{_gru_gate.1} parent=43 // pred_check_branch
          %295 = sbr.rel (%p293) target = $region48
        $region47: #{_gru_gate.1} parent=43 // pred_region
          %296 = dma.done %s289, 128
        $region48: #{_gru_gate.1} parent=43 // pred_fallthru
          _
        %s297 = sand.u32 %s27, 1
        %s298 = scalar_lea.sflag [#allocation6], %s297
        %s299 = sand.u32 %s61, 1
        %s300 = smul.addr %s299, 8
        %s301 = scalar_lea.vmem [#allocation5], %s300
        // Predicated region
        $region49: #{_gru_gate.1} parent=43 // pred_check
          %p302 = pneg %p74
        $region50: #{_gru_gate.1} parent=43 // pred_check_branch
          %304 = sbr.rel (%p302) target = $region52
        $region51: #{_gru_gate.1} parent=43 // pred_region
          %305 = dma.done %s298, 128
        $region52: #{_gru_gate.1} parent=43 // pred_fallthru
          _
        // Predicated region
        $region53: #{_gru_gate.1} parent=43 // pred_check
          %p306 = pneg %p95
        $region54: #{_gru_gate.1} parent=43 // pred_check_branch
          %308 = sbr.rel (%p306) target = $region56
        $region55: #{_gru_gate.1} parent=43 // pred_region
          %309 = dma.done [#allocation6], 4096
        $region56: #{_gru_gate.1} parent=43 // pred_fallthru
          _
        // Predicated region
        $region57: #{_gru_gate.1} parent=43 // pred_check
          %p310 = pneg %p116
        $region58: #{_gru_gate.1} parent=43 // pred_check_branch
          %312 = sbr.rel (%p310) target = $region60
        $region59: #{_gru_gate.1} parent=43 // pred_region
          %313 = dma.done [#allocation9], 1024
        $region60: #{_gru_gate.1} parent=43 // pred_fallthru
          _
        // Predicated region
        $region61: #{_gru_gate.1} parent=43 // pred_check
          %p314 = pneg %p137
        $region62: #{_gru_gate.1} parent=43 // pred_check_branch
          %316 = sbr.rel (%p314) target = $region64
        $region63: #{_gru_gate.1} parent=43 // pred_region
          %317 = dma.done [#allocation9], 1024
        $region64: #{_gru_gate.1} parent=43 // pred_fallthru
          _
        %s318 = sand.u32 %s35, 1
        %s319 = scalar_lea.sflag [#allocation3], %s318
        %s320 = sand.u32 %s35, 1
        %s321 = smul.addr %s320, 8
        %s322 = scalar_lea.vmem [#allocation2], %s321
        %p323 = pneg %p48
        %p324 = pneg %p45
        %s325 = sand.u32 %s27, 1
        %s326 = scalar_lea.sflag [#allocation6], %s325
        %s327 = sand.u32 %s61, 1
        %s328 = smul.addr %s327, 8
        %s329 = scalar_lea.vmem [#allocation5], %s328
        %p330 = pneg %p74
        %p331 = pneg %p71
        %p332 = pneg %p95
        %p333 = pneg %p92
        %p334 = pneg %p116
        %p335 = pneg %p113
        %p336 = pneg %p137
        %p337 = pneg %p134
        %p338 = pneg %p158
        %p339 = pneg %p155
        %p340 = pneg %p184
        %p341 = pneg %p181
        %s342 = sand.u32 %s171, 1
        %s343 = scalar_lea.sflag [#allocation4], %s342
        %s344 = sand.u32 %s171, 1
        %s345 = smul.addr %s344, 8
        %s346 = scalar_lea.vmem [#allocation11], %s345
        %v348 = vld [vmem:[%s292] sm:$0xff]
        %v349 = vld [vmem:[%s301] sm:$0xff]
        %v350 = vpack.c.bf16 %v349, %v349
        %v351 = vpack.c.bf16 %v348, %v348
        %v352 = vld [vmem:[#allocation7] sm:$0xff]
        %v353 = vld [vmem:[#allocation7 + $0x8] sm:$0xff]
        %v354 = vld [vmem:[#allocation7 + $0x10] sm:$0xff]
        %v355 = vld [vmem:[#allocation7 + $0x18] sm:$0xff]
        %v356 = vld [vmem:[#allocation7 + $0x20] sm:$0xff]
        %v357 = vld [vmem:[#allocation7 + $0x28] sm:$0xff]
        %v358 = vld [vmem:[#allocation7 + $0x30] sm:$0xff]
        %v359 = vld [vmem:[#allocation7 + $0x38] sm:$0xff]
        %v360 = vld [vmem:[#allocation7 + $0x40] sm:$0xff]
        %v361 = vld [vmem:[#allocation7 + $0x48] sm:$0xff]
        %v362 = vld [vmem:[#allocation7 + $0x50] sm:$0xff]
        %v363 = vld [vmem:[#allocation7 + $0x58] sm:$0xff]
        %v364 = vld [vmem:[#allocation7 + $0x60] sm:$0xff]
        %v365 = vld [vmem:[#allocation7 + $0x68] sm:$0xff]
        %v366 = vld [vmem:[#allocation7 + $0x70] sm:$0xff]
        %v367 = vld [vmem:[#allocation7 + $0x78] sm:$0xff]
        %v368 = vld [vmem:[#allocation7 + $0x80] sm:$0xff]
        %v369 = vld [vmem:[#allocation7 + $0x88] sm:$0xff]
        %v370 = vld [vmem:[#allocation7 + $0x90] sm:$0xff]
        %v371 = vld [vmem:[#allocation7 + $0x98] sm:$0xff]
        %v372 = vld [vmem:[#allocation7 + $0xa0] sm:$0xff]
        %v373 = vld [vmem:[#allocation7 + $0xa8] sm:$0xff]
        %v374 = vld [vmem:[#allocation7 + $0xb0] sm:$0xff]
        %v375 = vld [vmem:[#allocation7 + $0xb8] sm:$0xff]
        %v376 = vld [vmem:[#allocation7 + $0xc0] sm:$0xff]
        %v377 = vld [vmem:[#allocation7 + $0xc8] sm:$0xff]
        %v378 = vld [vmem:[#allocation7 + $0xd0] sm:$0xff]
        %v379 = vld [vmem:[#allocation7 + $0xd8] sm:$0xff]
        %v380 = vld [vmem:[#allocation7 + $0xe0] sm:$0xff]
        %v381 = vld [vmem:[#allocation7 + $0xe8] sm:$0xff]
        %v382 = vld [vmem:[#allocation7 + $0xf0] sm:$0xff]
        %v383 = vld [vmem:[#allocation7 + $0xf8] sm:$0xff]
        %v416 = vunpack.c.l.b16 %v352
        %v417 = vunpack.c.h.b16 %v352
        %v418 = vunpack.c.l.b16 %v353
        %v419 = vunpack.c.h.b16 %v353
        %v420 = vunpack.c.l.b16 %v354
        %v421 = vunpack.c.h.b16 %v354
        %v422 = vunpack.c.l.b16 %v355
        %v423 = vunpack.c.h.b16 %v355
        %v424 = vunpack.c.l.b16 %v356
        %v425 = vunpack.c.h.b16 %v356
        %v426 = vunpack.c.l.b16 %v357
        %v427 = vunpack.c.h.b16 %v357
        %v428 = vunpack.c.l.b16 %v358
        %v429 = vunpack.c.h.b16 %v358
        %v430 = vunpack.c.l.b16 %v359
        %v431 = vunpack.c.h.b16 %v359
        %v432 = vunpack.c.l.b16 %v360
        %v433 = vunpack.c.h.b16 %v360
        %v434 = vunpack.c.l.b16 %v361
        %v435 = vunpack.c.h.b16 %v361
        %v436 = vunpack.c.l.b16 %v362
        %v437 = vunpack.c.h.b16 %v362
        %v438 = vunpack.c.l.b16 %v363
        %v439 = vunpack.c.h.b16 %v363
        %v440 = vunpack.c.l.b16 %v364
        %v441 = vunpack.c.h.b16 %v364
        %v442 = vunpack.c.l.b16 %v365
        %v443 = vunpack.c.h.b16 %v365
        %v444 = vunpack.c.l.b16 %v366
        %v445 = vunpack.c.h.b16 %v366
        %v446 = vunpack.c.l.b16 %v367
        %v447 = vunpack.c.h.b16 %v367
        %v448 = vunpack.c.l.b16 %v368
        %v449 = vunpack.c.h.b16 %v368
        %v450 = vunpack.c.l.b16 %v369
        %v451 = vunpack.c.h.b16 %v369
        %v452 = vunpack.c.l.b16 %v370
        %v453 = vunpack.c.h.b16 %v370
        %v454 = vunpack.c.l.b16 %v371
        %v455 = vunpack.c.h.b16 %v371
        %v456 = vunpack.c.l.b16 %v372
        %v457 = vunpack.c.h.b16 %v372
        %v458 = vunpack.c.l.b16 %v373
        %v459 = vunpack.c.h.b16 %v373
        %v460 = vunpack.c.l.b16 %v374
        %v461 = vunpack.c.h.b16 %v374
        %v462 = vunpack.c.l.b16 %v375
        %v463 = vunpack.c.h.b16 %v375
        %v464 = vunpack.c.l.b16 %v376
        %v465 = vunpack.c.h.b16 %v376
        %v466 = vunpack.c.l.b16 %v377
        %v467 = vunpack.c.h.b16 %v377
        %v468 = vunpack.c.l.b16 %v378
        %v469 = vunpack.c.h.b16 %v378
        %v470 = vunpack.c.l.b16 %v379
        %v471 = vunpack.c.h.b16 %v379
        %v472 = vunpack.c.l.b16 %v380
        %v473 = vunpack.c.h.b16 %v380
        %v474 = vunpack.c.l.b16 %v381
        %v475 = vunpack.c.h.b16 %v381
        %v476 = vunpack.c.l.b16 %v382
        %v477 = vunpack.c.h.b16 %v382
        %v478 = vunpack.c.l.b16 %v383
        %v479 = vunpack.c.h.b16 %v383
        %v480 = vpack.c.b16 %v418, %v416
        %v481 = vpack.c.b16 %v419, %v417
        %v482 = vpack.c.b16 %v422, %v420
        %v483 = vpack.c.b16 %v423, %v421
        %v484 = vpack.c.b16 %v426, %v424
        %v485 = vpack.c.b16 %v427, %v425
        %v486 = vpack.c.b16 %v430, %v428
        %v487 = vpack.c.b16 %v431, %v429
        %v488 = vpack.c.b16 %v434, %v432
        %v489 = vpack.c.b16 %v435, %v433
        %v490 = vpack.c.b16 %v438, %v436
        %v491 = vpack.c.b16 %v439, %v437
        %v492 = vpack.c.b16 %v442, %v440
        %v493 = vpack.c.b16 %v443, %v441
        %v494 = vpack.c.b16 %v446, %v444
        %v495 = vpack.c.b16 %v447, %v445
        %v496 = vpack.c.b16 %v450, %v448
        %v497 = vpack.c.b16 %v451, %v449
        %v498 = vpack.c.b16 %v454, %v452
        %v499 = vpack.c.b16 %v455, %v453
        %v500 = vpack.c.b16 %v458, %v456
        %v501 = vpack.c.b16 %v459, %v457
        %v502 = vpack.c.b16 %v462, %v460
        %v503 = vpack.c.b16 %v463, %v461
        %v504 = vpack.c.b16 %v466, %v464
        %v505 = vpack.c.b16 %v467, %v465
        %v506 = vpack.c.b16 %v470, %v468
        %v507 = vpack.c.b16 %v471, %v469
        %v508 = vpack.c.b16 %v474, %v472
        %v509 = vpack.c.b16 %v475, %v473
        %v510 = vpack.c.b16 %v478, %v476
        %v511 = vpack.c.b16 %v479, %v477
        %544 = vmatprep.subr.bf16.mxu0 %v481
        %545 = vmatpush1.bf16.msra.mxu0 %v480
        %546 = vmatprep.subr.bf16.mxu0 %v483
        %547 = vmatpush1.bf16.msra.mxu0 %v482
        %548 = vmatprep.subr.bf16.mxu0 %v485
        %549 = vmatpush1.bf16.msra.mxu0 %v484
        %550 = vmatprep.subr.bf16.mxu0 %v487
        %551 = vmatpush1.bf16.msra.mxu0 %v486
        %552 = vmatprep.subr.bf16.mxu0 %v489
        %553 = vmatpush1.bf16.msra.mxu0 %v488
        %554 = vmatprep.subr.bf16.mxu0 %v491
        %555 = vmatpush1.bf16.msra.mxu0 %v490
        %556 = vmatprep.subr.bf16.mxu0 %v493
        %557 = vmatpush1.bf16.msra.mxu0 %v492
        %558 = vmatprep.subr.bf16.mxu0 %v495
        %559 = vmatpush1.bf16.msra.mxu0 %v494
        %560 = vmatprep.subr.bf16.mxu0 %v497
        %561 = vmatpush1.bf16.msra.mxu0 %v496
        %562 = vmatprep.subr.bf16.mxu0 %v499
        %563 = vmatpush1.bf16.msra.mxu0 %v498
        %564 = vmatprep.subr.bf16.mxu0 %v501
        %565 = vmatpush1.bf16.msra.mxu0 %v500
        %566 = vmatprep.subr.bf16.mxu0 %v503
        %567 = vmatpush1.bf16.msra.mxu0 %v502
        %568 = vmatprep.subr.bf16.mxu0 %v505
        %569 = vmatpush1.bf16.msra.mxu0 %v504
        %570 = vmatprep.subr.bf16.mxu0 %v507
        %571 = vmatpush1.bf16.msra.mxu0 %v506
        %572 = vmatprep.subr.bf16.mxu0 %v509
        %573 = vmatpush1.bf16.msra.mxu0 %v508
        %574 = vmatprep.subr.bf16.mxu0 %v511
        %575 = vmatpush1.bf16.msra.mxu0 %v510
        %576 = vmatprep.mubr.bf16.mxu0 %v351
        %577 = vmatmul.mubr.bf16.gmra.mrb[0].mxu0 %v350
        %v578 = vpop.f32.mrb[0].mxu0
        %v579 = vadd.f32 0.0, %v578
        %v580 = vpop.f32.mrb[0].mxu0
        %v581 = vadd.f32 0.0, %v580
        %v582 = vpop.f32.mrb[0].mxu0
        %v583 = vpop.f32.mrb[0].mxu0
        %584 = vdwg.mxu0
        %v585 = vld [vmem:[%s5] sm:$0x1]
        %v587 = vlaneseq
        %v588 = vshrl.u32 %v587, 7
        %v589 = vsub.s32 0, %v588
        %v590 = vrot.slane %v585, %v589
        %v592 = vadd.f32 %v579, %v590
        %v593 = vxor.u32 %v592, 2147483648
        %v594 = vmul.f32 %v593, 1.442695
        %v595 = vpow.pop %v594
        %v596 = vadd.f32 %v595, 1.0
        %v597 = vrcp.pop %v596
        %v598 = vmul.f32 1.0, %v597
        %v599 = vxor.u32 %v581, 2147483648
        %v600 = vmul.f32 %v599, 1.442695
        %v601 = vpow.pop %v600
        %v602 = vadd.f32 %v601, 1.0
        %v603 = vrcp.pop %v602
        %v604 = vmul.f32 1.0, %v603
        %v605 = vld [vmem:[#allocation8] sm:$0xf]
        %v606 = vld [vmem:[#allocation8 + $0x4] sm:$0xf]
        %v607 = vld [vmem:[#allocation8 + $0x8] sm:$0xf]
        %v608 = vld [vmem:[#allocation8 + $0xc] sm:$0xf]
        %v609 = vld [vmem:[#allocation8 + $0x10] sm:$0xf]
        %v610 = vld [vmem:[#allocation8 + $0x14] sm:$0xf]
        %v611 = vld [vmem:[#allocation8 + $0x18] sm:$0xf]
        %v612 = vld [vmem:[#allocation8 + $0x1c] sm:$0xf]
        %v613 = vld [vmem:[#allocation8 + $0x20] sm:$0xf]
        %v614 = vld [vmem:[#allocation8 + $0x24] sm:$0xf]
        %v615 = vld [vmem:[#allocation8 + $0x28] sm:$0xf]
        %v616 = vld [vmem:[#allocation8 + $0x2c] sm:$0xf]
        %v617 = vld [vmem:[#allocation8 + $0x30] sm:$0xf]
        %v618 = vld [vmem:[#allocation8 + $0x34] sm:$0xf]
        %v619 = vld [vmem:[#allocation8 + $0x38] sm:$0xf]
        %v620 = vld [vmem:[#allocation8 + $0x3c] sm:$0xf]
        %v621 = vmul.f32 %v604, %v348
        %v622 = vpack.c.bf16 %v621, %v621
        %v623 = vld [vmem:[#allocation10] sm:$0xf]
        %v624 = vld [vmem:[#allocation10 + $0x4] sm:$0xf]
        %v625 = vld [vmem:[#allocation10 + $0x8] sm:$0xf]
        %v626 = vld [vmem:[#allocation10 + $0xc] sm:$0xf]
        %v627 = vld [vmem:[#allocation10 + $0x10] sm:$0xf]
        %v628 = vld [vmem:[#allocation10 + $0x14] sm:$0xf]
        %v629 = vld [vmem:[#allocation10 + $0x18] sm:$0xf]
        %v630 = vld [vmem:[#allocation10 + $0x1c] sm:$0xf]
        %v631 = vld [vmem:[#allocation10 + $0x20] sm:$0xf]
        %v632 = vld [vmem:[#allocation10 + $0x24] sm:$0xf]
        %v633 = vld [vmem:[#allocation10 + $0x28] sm:$0xf]
        %v634 = vld [vmem:[#allocation10 + $0x2c] sm:$0xf]
        %v635 = vld [vmem:[#allocation10 + $0x30] sm:$0xf]
        %v636 = vld [vmem:[#allocation10 + $0x34] sm:$0xf]
        %v637 = vld [vmem:[#allocation10 + $0x38] sm:$0xf]
        %v638 = vld [vmem:[#allocation10 + $0x3c] sm:$0xf]
        %v655 = vunpack.c.l.b16 %v623
        %v656 = vunpack.c.l.b16 %v624
        %v657 = vunpack.c.l.b16 %v625
        %v658 = vunpack.c.l.b16 %v626
        %v659 = vunpack.c.l.b16 %v627
        %v660 = vunpack.c.l.b16 %v628
        %v661 = vunpack.c.l.b16 %v629
        %v662 = vunpack.c.l.b16 %v630
        %v663 = vunpack.c.l.b16 %v631
        %v664 = vunpack.c.l.b16 %v632
        %v665 = vunpack.c.l.b16 %v633
        %v666 = vunpack.c.l.b16 %v634
        %v667 = vunpack.c.l.b16 %v635
        %v668 = vunpack.c.l.b16 %v636
        %v669 = vunpack.c.l.b16 %v637
        %v670 = vunpack.c.l.b16 %v638
        %v671 = vpack.c.b16 %v656, %v655
        %v672 = vpack.c.b16 %v658, %v657
        %v673 = vpack.c.b16 %v660, %v659
        %v674 = vpack.c.b16 %v662, %v661
        %v675 = vpack.c.b16 %v664, %v663
        %v676 = vpack.c.b16 %v666, %v665
        %v677 = vpack.c.b16 %v668, %v667
        %v678 = vpack.c.b16 %v670, %v669
        %687 = vmatprep.subr.bf16.mxu0 0
        %688 = vmatpush1.bf16.msra.mxu0 %v671
        %689 = vmatprep.subr.bf16.mxu0 0
        %690 = vmatpush1.bf16.msra.mxu0 %v672
        %691 = vmatprep.subr.bf16.mxu0 0
        %692 = vmatpush1.bf16.msra.mxu0 %v673
        %693 = vmatprep.subr.bf16.mxu0 0
        %694 = vmatpush1.bf16.msra.mxu0 %v674
        %695 = vmatprep.subr.bf16.mxu0 0
        %696 = vmatpush1.bf16.msra.mxu0 %v675
        %697 = vmatprep.subr.bf16.mxu0 0
        %698 = vmatpush1.bf16.msra.mxu0 %v676
        %699 = vmatprep.subr.bf16.mxu0 0
        %700 = vmatpush1.bf16.msra.mxu0 %v677
        %701 = vmatprep.subr.bf16.mxu0 0
        %702 = vmatpush1.bf16.msra.mxu0 %v678
        %703 = vmatprep.subr.bf16.mxu0 0
        %704 = vmatpush1.bf16.msra.mxu0 0
        %705 = vmatprep.subr.bf16.mxu0 0
        %706 = vmatpush1.bf16.msra.mxu0 0
        %707 = vmatprep.subr.bf16.mxu0 0
        %708 = vmatpush1.bf16.msra.mxu0 0
        %709 = vmatprep.subr.bf16.mxu0 0
        %710 = vmatpush1.bf16.msra.mxu0 0
        %711 = vmatprep.subr.bf16.mxu0 0
        %712 = vmatpush1.bf16.msra.mxu0 0
        %713 = vmatprep.subr.bf16.mxu0 0
        %714 = vmatpush1.bf16.msra.mxu0 0
        %715 = vmatprep.subr.bf16.mxu0 0
        %716 = vmatpush1.bf16.msra.mxu0 0
        %717 = vmatprep.subr.bf16.mxu0 0
        %718 = vmatpush1.bf16.msra.mxu0 0
        %719 = vmatprep.mubr.bf16.mxu0 0
        %720 = vmatmul.mubr.bf16.gmra.mrb[0].mxu0 %v622
        %v721 = vpop.f32.mrb[0].mxu0
        %v722 = vadd.f32 0.0, %v721
        %v723 = vpop.f32.mrb[0].mxu0
        %v724 = vpop.f32.mrb[0].mxu0
        %v725 = vpop.f32.mrb[0].mxu0
        %726 = vdwg.mxu0
        %v743 = vunpack.c.l.b16 %v605
        %v744 = vunpack.c.l.b16 %v606
        %v745 = vunpack.c.l.b16 %v607
        %v746 = vunpack.c.l.b16 %v608
        %v747 = vunpack.c.l.b16 %v609
        %v748 = vunpack.c.l.b16 %v610
        %v749 = vunpack.c.l.b16 %v611
        %v750 = vunpack.c.l.b16 %v612
        %v751 = vunpack.c.l.b16 %v613
        %v752 = vunpack.c.l.b16 %v614
        %v753 = vunpack.c.l.b16 %v615
        %v754 = vunpack.c.l.b16 %v616
        %v755 = vunpack.c.l.b16 %v617
        %v756 = vunpack.c.l.b16 %v618
        %v757 = vunpack.c.l.b16 %v619
        %v758 = vunpack.c.l.b16 %v620
        %v759 = vpack.c.b16 %v744, %v743
        %v760 = vpack.c.b16 %v746, %v745
        %v761 = vpack.c.b16 %v748, %v747
        %v762 = vpack.c.b16 %v750, %v749
        %v763 = vpack.c.b16 %v752, %v751
        %v764 = vpack.c.b16 %v754, %v753
        %v765 = vpack.c.b16 %v756, %v755
        %v766 = vpack.c.b16 %v758, %v757
        %775 = vmatprep.subr.bf16.mxu0 0
        %776 = vmatpush1.bf16.msra.mxu0 %v759
        %777 = vmatprep.subr.bf16.mxu0 0
        %778 = vmatpush1.bf16.msra.mxu0 %v760
        %779 = vmatprep.subr.bf16.mxu0 0
        %780 = vmatpush1.bf16.msra.mxu0 %v761
        %781 = vmatprep.subr.bf16.mxu0 0
        %782 = vmatpush1.bf16.msra.mxu0 %v762
        %783 = vmatprep.subr.bf16.mxu0 0
        %784 = vmatpush1.bf16.msra.mxu0 %v763
        %785 = vmatprep.subr.bf16.mxu0 0
        %786 = vmatpush1.bf16.msra.mxu0 %v764
        %787 = vmatprep.subr.bf16.mxu0 0
        %788 = vmatpush1.bf16.msra.mxu0 %v765
        %789 = vmatprep.subr.bf16.mxu0 0
        %790 = vmatpush1.bf16.msra.mxu0 %v766
        %791 = vmatprep.subr.bf16.mxu0 0
        %792 = vmatpush1.bf16.msra.mxu0 0
        %793 = vmatprep.subr.bf16.mxu0 0
        %794 = vmatpush1.bf16.msra.mxu0 0
        %795 = vmatprep.subr.bf16.mxu0 0
        %796 = vmatpush1.bf16.msra.mxu0 0
        %797 = vmatprep.subr.bf16.mxu0 0
        %798 = vmatpush1.bf16.msra.mxu0 0
        %799 = vmatprep.subr.bf16.mxu0 0
        %800 = vmatpush1.bf16.msra.mxu0 0
        %801 = vmatprep.subr.bf16.mxu0 0
        %802 = vmatpush1.bf16.msra.mxu0 0
        %803 = vmatprep.subr.bf16.mxu0 0
        %804 = vmatpush1.bf16.msra.mxu0 0
        %805 = vmatprep.subr.bf16.mxu0 0
        %806 = vmatpush1.bf16.msra.mxu0 0
        %807 = vmatprep.mubr.bf16.mxu0 0
        %808 = vmatmul.mubr.bf16.gmra.mrb[0].mxu0 %v350
        %v809 = vpop.f32.mrb[0].mxu0
        %v810 = vadd.f32 %v722, %v809
        %v811 = vpop.f32.mrb[0].mxu0
        %v812 = vpop.f32.mrb[0].mxu0
        %v813 = vpop.f32.mrb[0].mxu0
        %814 = vdwg.mxu0
        %v815 = vtanh.pop %v810
        %v816 = vsub.f32 1.0, %v598
        %v817 = vmul.f32 %v816, %v348
        %v818 = vmul.f32 %v598, %v815
        %v819 = vadd.f32 %v817, %v818
        %820 = vst [vmem:[%s346] sm:$0xff] %v819
        %s821 = sand.u32 %s171, 1
        %s822 = scalar_lea.sflag [#allocation4], %s821
        %s823 = sand.u32 %s171, 1
        %s824 = smul.addr %s823, 8
        %s825 = scalar_lea.vmem [#allocation11], %s824
        // Predicated region
        $region65: #{_gru_gate.1} parent=43 // pred_check
          %p826 = pneg %p181
        $region66: #{_gru_gate.1} parent=43 // pred_check_branch
          %828 = sbr.rel (%p826) target = $region68
        $region67: #{_gru_gate.1} parent=43 // pred_region
          %s830 = ssub.s32 128, 128
          %831 = vsyncadd %s822, %s830
          %s832 = smul.addr %s27, 128
          %s833 = scalar_lea.hbm %s6, %s832
          %s835 = sshll.u32 %s825, 4
          %s836 = int_to_ptr.vmem [resolvable:$true] %s835
          %838 = dma.vmem_to_hbm [thread:$0]  %s836, 128, %s833, %s822
        $region68: #{_gru_gate.1} parent=43 // pred_fallthru
          _
      $region44: #{_gru_gate.1} parent=5 // pred_fallthru
        _
      %p839 = scmp.le.s32.totalorder 2, %s22
      // Predicated region
      $region69: #{_gru_gate.1} parent=5 // pred_check
        %p840 = pneg %p839
      $region70: #{_gru_gate.1} parent=5 // pred_check_branch
        %842 = sbr.rel (%p840) target = $region72
      $region71: #{_gru_gate.1} parent=5 // pred_region
        %s843 = ssub.s32 %s22, 2
        // Predicated region
        $region73: #{_gru_gate.1} parent=71 // pred_check
          %p844 = pneg %p187
        $region74: #{_gru_gate.1} parent=71 // pred_check_branch
          %846 = sbr.rel (%p844) target = $region76
        $region75: #{_gru_gate.1} parent=71 // pred_region
          %s847 = sand.u32 %s172, 1
          %s848 = scalar_lea.sflag [#allocation4], %s847
          %s849 = sand.u32 %s172, 1
          %s850 = smul.addr %s849, 8
          %s851 = scalar_lea.vmem [#allocation11], %s850
          %852 = dma.done %s848, 128
        $region76: #{_gru_gate.1} parent=71 // pred_fallthru
          _
      $region72: #{_gru_gate.1} parent=5 // pred_fallthru
        _
    $region6: #{_gru_gate.1} parent=1 // loop_footer
      %s26 = sadd.s32 1, %s22
    $region7: #{_gru_gate.1} parent=1 // loop_footer_branch
      %21 = sbr.rel target = $region3
    $region8: #{_gru_gate.1} parent=1 // loop_exit
      _
    %853 = vsyncpa [#allocation3], 1
    %s854 = scalar_lea.sflag [#allocation3], 1
    %855 = vsyncpa %s854, 1
    %856 = vsyncpa [#allocation6], 1
    %s857 = scalar_lea.sflag [#allocation6], 1
    %858 = vsyncpa %s857, 1
    %859 = vsyncpa [#allocation9], 1
    %860 = vsyncpa [#allocation4], 1
    %s861 = scalar_lea.sflag [#allocation4], 1
    %862 = vsyncpa %s861, 1

</llo_original>
